<compile_context>
chip_gen: v6e
topology: v6e:2x2x1
jax: 0.10.0
libtpu: 0.0.40
codegen_flags: <defaults>
</compile_context>

<pallas_src>
import functools

import numpy as np
import jax
import jax.numpy as jnp
from jax import lax
from jax.experimental import pallas as pl
from jax.experimental.pallas import tpu as pltpu


CPAD = 128          # all channel dims zero-padded to one full lane tile
OUT_ROWS = 8        # sublane-aligned output block height


# --------------------------------------------------------------------------
# Fused whole-network kernel (one grid step = one batch element)
# --------------------------------------------------------------------------
def _mobilenet_kernel(x_ref, stem_w_ref, stem_s_ref, dw_w_ref, dw_s_ref,
                      pw_w_ref, pw_s_ref, fc_w_ref, fc_b_ref,
                      o_ref, xpad_ref, patch_ref, *, hh, ww, cpad, n_blocks):
    """One batch element of MobileNet, fully VMEM resident.

    x_ref:      (hh+1, ww+1, cpad)     space-to-depth stem input (zero chan-pad)
    stem_w_ref: (4*cpad, cpad)         2x2-tap stem weight (BN scale folded)
    dw_w_ref:   (nb, 9*cpad, cpad)     per-block 3x3 im2col weights
    pw_w_ref:   (nb, cpad, cpad)       per-block 1x1 weights
    *_s_ref:    per-channel shifts (BN shift + bias*scale), zero on pad chans
    fc_w_ref:   (cpad, cpad)           pooled-features -> padded-classes
    o_ref:      (OUT_ROWS, cpad)       logits broadcast across sublanes
    xpad_ref:   (hh+2, ww+2, cpad)     zero-halo activation scratch
    patch_ref:  (hh*ww, 9*cpad)        im2col patch scratch
    """
    m = hh * ww

    # ---- stem: 3x3/s2 conv realized as a 2x2/s1 conv over the space-to-depth
    #      input; im2col into the patch scratch -> one MXU matmul.
    x = x_ref[...]
    for a in range(2):
        for b in range(2):
            t = a * 2 + b
            patch_ref[:, t * cpad:(t + 1) * cpad] = (
                x[a:a + hh, b:b + ww, :].reshape(m, cpad))
    y = jnp.dot(patch_ref[:, :4 * cpad], stem_w_ref[...],
                preferred_element_type=jnp.float32)
    act = jnp.maximum(y + stem_s_ref[...], 0.0)                 # (m, cpad) f32

    # Zero the halo once; the interior is rewritten every block, borders never.
    xpad_ref[...] = jnp.zeros_like(xpad_ref)

    # ---- 13 depthwise-separable blocks (3x3 conv + shift/ReLU -> 1x1 + shift/ReLU)
    def block(i, act):
        xpad_ref[1:1 + hh, 1:1 + ww, :] = act.reshape(hh, ww, cpad)
        xp = xpad_ref[...]
        for ky in range(3):
            for kx in range(3):
                t = ky * 3 + kx
                patch_ref[:, t * cpad:(t + 1) * cpad] = (
                    xp[ky:ky + hh, kx:kx + ww, :].reshape(m, cpad))
        y = jnp.dot(patch_ref[...], dw_w_ref[i],
                    preferred_element_type=jnp.float32)
        act = jnp.maximum(y + dw_s_ref[i], 0.0)
        y = jnp.dot(act, pw_w_ref[i], preferred_element_type=jnp.float32)
        return jnp.maximum(y + pw_s_ref[i], 0.0)

    act = lax.fori_loop(0, n_blocks, block, act)

    # ---- global average pool + linear head, fused epilogue.
    pooled = jnp.mean(act, axis=0, keepdims=True)               # (1, cpad)
    logits = jnp.dot(pooled, fc_w_ref[...],
                     preferred_element_type=jnp.float32) + fc_b_ref[...]
    o_ref[...] = jnp.broadcast_to(logits, o_ref.shape)


# --------------------------------------------------------------------------
# Parameter preparation: BN folding, channel padding to 128, weight stacking
# --------------------------------------------------------------------------
def fold_bn(bn, eps=1e-5):
    gamma, beta, mean, var = bn
    scale = gamma / jnp.sqrt(var + eps)
    return scale, beta - mean * scale


def prepare_params(params, cpad=CPAD):
    # --- stem: rearrange 3x3 stride-2 HWIO weight into a 2x2 stride-1 weight
    #     over space-to-depth channels, fold BN scale, pad to (4*cpad, cpad).
    stem = params['stem']
    w = stem['w']                                   # (3, 3, Cin, C0)
    scale, shift = fold_bn(stem['bn'])
    kin, c0 = w.shape[2], w.shape[3]
    w2 = jnp.zeros((2, 2, 2, 2, kin, c0), jnp.float32)   # (a, b, p, q, cin, c0)
    for ky in range(3):
        a, p = divmod(ky, 2)
        for kx in range(3):
            b, q = divmod(kx, 2)
            w2 = w2.at[a, b, p, q].set(w[ky, kx])
    w2 = w2.reshape(2, 2, 4 * kin, c0) * scale            # fold BN scale
    stem_w = jnp.zeros((2, 2, cpad, cpad), jnp.float32).at[:, :, :4 * kin, :c0].set(w2)
    stem_w = stem_w.reshape(4 * cpad, cpad)
    stem_s = jnp.zeros((1, cpad), jnp.float32).at[0, :c0].set(shift)

    # --- 13 blocks
    dw_ws, dw_ss, pw_ws, pw_ss = [], [], [], []
    for blk in params['blocks']:
        scale, shift = fold_bn(blk['dw_bn'])
        cin, cout = blk['dw_w'].shape[2], blk['dw_w'].shape[3]
        wf = blk['dw_w'] * scale
        wp = jnp.zeros((3, 3, cpad, cpad), jnp.float32).at[:, :, :cin, :cout].set(wf)
        dw_ws.append(wp.reshape(9 * cpad, cpad))
        dw_ss.append(jnp.zeros((1, cpad), jnp.float32)
                     .at[0, :cout].set(shift + blk['dw_b'] * scale))

        scale, shift = fold_bn(blk['pw_bn'])
        cin, cout = blk['pw_w'].shape
        wp = jnp.zeros((cpad, cpad), jnp.float32).at[:cin, :cout].set(blk['pw_w'] * scale)
        pw_ws.append(wp)
        pw_ss.append(jnp.zeros((1, cpad), jnp.float32)
                     .at[0, :cout].set(shift + blk['pw_b'] * scale))

    # --- head
    fc_w, fc_b = params['fc_w'], params['fc_b']
    c5, ncls = fc_w.shape
    fcw = jnp.zeros((cpad, cpad), jnp.float32).at[:c5, :ncls].set(fc_w)
    fcb = jnp.zeros((1, cpad), jnp.float32).at[0, :ncls].set(fc_b)

    return {
        'stem_w': stem_w, 'stem_s': stem_s,
        'dw_w': jnp.stack(dw_ws), 'dw_s': jnp.stack(dw_ss),
        'pw_w': jnp.stack(pw_ws), 'pw_s': jnp.stack(pw_ss),
        'fc_w': fcw, 'fc_b': fcb,
    }


# --------------------------------------------------------------------------
# Pallas wrapper (single fused call)
# --------------------------------------------------------------------------
def mobilenet_pallas(x_nchw, prep, *, num_classes, cpad=CPAD):
    x = jnp.transpose(x_nchw, (0, 2, 3, 1)).astype(jnp.float32)   # NCHW -> NHWC
    N, H, W, C = x.shape
    hh, ww = H // 2, W // 2            # spatial size after the stride-2 stem
    hp, wp = hh + 1, ww + 1

    # stem stride-2 pad-1 conv is run as a 2x2 stride-1 conv over the
    # space-to-depth'd, spatially padded input; channels lane-padded to 128.
    xp = jnp.pad(x, ((0, 0), (1, 1), (1, 1), (0, 0)))
    xs = xp.reshape(N, hp, 2, wp, 2, C)
    xs = jnp.transpose(xs, (0, 1, 3, 2, 4, 5)).reshape(N, hp, wp, 4 * C)
    xs = jnp.pad(xs, ((0, 0), (0, 0), (0, 0), (0, cpad - 4 * C)))

    nb = prep['dw_w'].shape[0]
    kernel = functools.partial(_mobilenet_kernel, hh=hh, ww=ww,
                               cpad=cpad, n_blocks=nb)

    out = pl.pallas_call(
        kernel,
        out_shape=jax.ShapeDtypeStruct((N, OUT_ROWS, cpad), jnp.float32),
        grid=(N,),
        in_specs=[
            pl.BlockSpec((None, hp, wp, cpad), lambda n: (n, 0, 0, 0)),   # x (s2d)
            pl.BlockSpec((4 * cpad, cpad), lambda n: (0, 0)),             # stem w
            pl.BlockSpec((1, cpad), lambda n: (0, 0)),                    # stem shift
            pl.BlockSpec((nb, 9 * cpad, cpad), lambda n: (0, 0, 0)),      # dw w
            pl.BlockSpec((nb, 1, cpad), lambda n: (0, 0, 0)),             # dw shift
            pl.BlockSpec((nb, cpad, cpad), lambda n: (0, 0, 0)),          # pw w
            pl.BlockSpec((nb, 1, cpad), lambda n: (0, 0, 0)),             # pw shift
            pl.BlockSpec((cpad, cpad), lambda n: (0, 0)),                 # fc w
            pl.BlockSpec((1, cpad), lambda n: (0, 0)),                    # fc b
        ],
        out_specs=pl.BlockSpec((None, OUT_ROWS, cpad), lambda n: (n, 0, 0)),
        scratch_shapes=[
            pltpu.VMEM((hh + 2, ww + 2, cpad), jnp.float32),   # zero-halo activation
            pltpu.VMEM((hh * ww, 9 * cpad), jnp.float32),      # im2col patch buffer
        ],
        compiler_params=pltpu.CompilerParams(
            dimension_semantics=("parallel",),
            vmem_limit_bytes=32 * 1024 * 1024),
    )(xs, prep['stem_w'], prep['stem_s'], prep['dw_w'], prep['dw_s'],
      prep['pw_w'], prep['pw_s'], prep['fc_w'], prep['fc_b'])

    return out[:, 0, :num_classes]


# --------------------------------------------------------------------------
# Pure-JAX reference (independent, unfused, f32 HIGHEST) for correctness check
# --------------------------------------------------------------------------
def ref_forward(x_nchw, params):
    x = jnp.transpose(x_nchw, (0, 2, 3, 1)).astype(jnp.float32)
    hp = lax.Precision.HIGHEST

    def bn_relu(y, bn):
        gamma, beta, mean, var = bn
        return jnp.maximum((y - mean) / jnp.sqrt(var + 1e-5) * gamma + beta, 0.0)

    stem = params['stem']
    y = lax.conv_general_dilated(x, stem['w'], (2, 2), [(1, 1), (1, 1)],
                                 dimension_numbers=('NHWC', 'HWIO', 'NHWC'), precision=hp)
    x = bn_relu(y, stem['bn'])

    for blk in params['blocks']:
        y = lax.conv_general_dilated(x, blk['dw_w'], (1, 1), [(1, 1), (1, 1)],
                                     dimension_numbers=('NHWC', 'HWIO', 'NHWC'),
                                     precision=hp) + blk['dw_b']
        x = bn_relu(y, blk['dw_bn'])
        y = lax.conv_general_dilated(x, blk['pw_w'][None, None], (1, 1), [(0, 0), (0, 0)],
                                     dimension_numbers=('NHWC', 'HWIO', 'NHWC'),
                                     precision=hp) + blk['pw_b']
        x = bn_relu(y, blk['pw_bn'])

    pooled = jnp.mean(x, axis=(1, 2))
    return jnp.dot(pooled, params['fc_w'], precision=hp) + params['fc_b']


# --------------------------------------------------------------------------
# Deterministic parameter initialization (synthetic; no checkpoint)
# --------------------------------------------------------------------------
def init_mobilenet_params(key, in_channels, channels, num_classes):
    keys = iter(jax.random.split(key, 256))

    def nxt():
        return next(keys)

    def conv_w(kh, kw, cin, cout):
        return jax.random.normal(nxt(), (kh, kw, cin, cout), jnp.float32) / np.sqrt(kh * kw * cin)

    def bn_params(c):
        gamma = 1.0 + 0.1 * jax.random.normal(nxt(), (c,), jnp.float32)
        beta = 0.1 * jax.random.normal(nxt(), (c,), jnp.float32)
        mean = 0.1 * jax.random.normal(nxt(), (c,), jnp.float32)
        var = 1.0 + 0.1 * jax.random.uniform(nxt(), (c,), jnp.float32)
        return (gamma, beta, mean, var)

    stem = {'w': conv_w(3, 3, in_channels, channels[0]), 'bn': bn_params(channels[0])}

    block_io = [(channels[0], channels[1]), (channels[1], channels[2]),
                (channels[2], channels[2]), (channels[2], channels[3]),
                (channels[3], channels[3]), (channels[3], channels[4])] + \
               [(channels[4], channels[4])] * 5 + \
               [(channels[4], channels[5]), (channels[5], channels[5])]

    blocks = []
    for cin, cout in block_io:
        blocks.append({
            'dw_w': conv_w(3, 3, cin, cin),
            'dw_b': 0.1 * jax.random.normal(nxt(), (cin,), jnp.float32),
            'dw_bn': bn_params(cin),
            'pw_w': conv_w(1, 1, cin, cout)[0, 0],            # (cin, cout)
            'pw_b': 0.1 * jax.random.normal(nxt(), (cout,), jnp.float32),
            'pw_bn': bn_params(cout),
        })

    fc_w = jax.random.normal(nxt(), (channels[5], num_classes), jnp.float32) / np.sqrt(channels[5])
    fc_b = 0.1 * jax.random.normal(nxt(), (num_classes,), jnp.float32)
    return {'stem': stem, 'blocks': blocks, 'fc_w': fc_w, 'fc_b': fc_b}


# --------------------------------------------------------------------------
if __name__ == "__main__":
    cfg = {'in_channels': 3, 'num_classes': 10,
           'channels': [8, 16, 16, 32, 32, 64], 'width_multiplier': 1.0}
    channels = [int(c * cfg['width_multiplier']) for c in cfg['channels']]

    key = jax.random.PRNGKey(0)
    pkey, xkey = jax.random.split(key)
    params = init_mobilenet_params(pkey, cfg['in_channels'], channels, cfg['num_classes'])

    # input in PyTorch NCHW convention
    x = jax.random.normal(xkey, (2, cfg['in_channels'], 16, 16), jnp.float32)

    prep = prepare_params(params)                      # one-time BN fold / pad / stack
    fwd = jax.jit(functools.partial(mobilenet_pallas, num_classes=cfg['num_classes']))

    out = jax.block_until_ready(fwd(x, prep))
    assert out.shape == (2, cfg['num_classes'])

    ref = ref_forward(x, params)
    np.testing.assert_allclose(np.asarray(out), np.asarray(ref), rtol=2e-3, atol=2e-3)

    print("KERNEL_OK")
</pallas_src>

<mosaic_0001>
module attributes {stable_mosaic.version = 11 : i64} {
  func.func @_mobilenet_kernel(%arg0: i32, %arg1: memref<1x9x9x128xf32, #tpu.memory_space<vmem>>, %arg2: memref<512x128xf32, #tpu.memory_space<vmem>>, %arg3: memref<1x128xf32, #tpu.memory_space<vmem>>, %arg4: memref<13x1152x128xf32, #tpu.memory_space<vmem>>, %arg5: memref<13x1x128xf32, #tpu.memory_space<vmem>>, %arg6: memref<13x128x128xf32, #tpu.memory_space<vmem>>, %arg7: memref<13x1x128xf32, #tpu.memory_space<vmem>>, %arg8: memref<128x128xf32, #tpu.memory_space<vmem>>, %arg9: memref<1x128xf32, #tpu.memory_space<vmem>>, %arg10: memref<1x8x128xf32, #tpu.memory_space<vmem>>, %arg11: memref<10x10x128xf32, #tpu.memory_space<vmem>>, %arg12: memref<64x1152xf32, #tpu.memory_space<vmem>>) attributes {dimension_semantics = [#tpu.dimension_semantics<parallel>], iteration_bounds = array<i64: 2>, scalar_prefetch = 0 : i64, scratch_operands = 2 : i64, tpu.core_type = #tpu.core_type<tc>, window_params = [{transform_indices = @transform_0, window_bounds = array<i64: 1, 9, 9, 128>}, {pipeline_mode = #tpu.pipeline_mode<synchronous>, transform_indices = @transform_1, window_bounds = array<i64: 512, 128>}, {pipeline_mode = #tpu.pipeline_mode<synchronous>, transform_indices = @transform_2, window_bounds = array<i64: 1, 128>}, {pipeline_mode = #tpu.pipeline_mode<synchronous>, transform_indices = @transform_3, window_bounds = array<i64: 13, 1152, 128>}, {pipeline_mode = #tpu.pipeline_mode<synchronous>, transform_indices = @transform_4, window_bounds = array<i64: 13, 1, 128>}, {pipeline_mode = #tpu.pipeline_mode<synchronous>, transform_indices = @transform_5, window_bounds = array<i64: 13, 128, 128>}, {pipeline_mode = #tpu.pipeline_mode<synchronous>, transform_indices = @transform_6, window_bounds = array<i64: 13, 1, 128>}, {pipeline_mode = #tpu.pipeline_mode<synchronous>, transform_indices = @transform_7, window_bounds = array<i64: 128, 128>}, {pipeline_mode = #tpu.pipeline_mode<synchronous>, transform_indices = @transform_8, window_bounds = array<i64: 1, 128>}, {transform_indices = @transform_9, window_bounds = array<i64: 1, 8, 128>}]} {
    %c0 = arith.constant 0 : index
    %c0_0 = arith.constant 0 : index
    %c0_1 = arith.constant 0 : index
    %c0_2 = arith.constant 0 : index
    %0 = vector.load %arg1[%c0, %c0_0, %c0_1, %c0_2] : memref<1x9x9x128xf32, #tpu.memory_space<vmem>>, vector<1x9x9x128xf32>
    %1 = vector.shape_cast %0 : vector<1x9x9x128xf32> to vector<9x9x128xf32>
    %2 = vector.extract_strided_slice %1 {offsets = [0, 0, 0], sizes = [8, 8, 128], strides = [1, 1, 1]} : vector<9x9x128xf32> to vector<8x8x128xf32>
    %3 = vector.shape_cast %2 : vector<8x8x128xf32> to vector<64x128xf32>
    %c0_3 = arith.constant 0 : index
    %c0_4 = arith.constant 0 : index
    %4 = vector.load %arg12[%c0_3, %c0_4] : memref<64x1152xf32, #tpu.memory_space<vmem>>, vector<64x128xf32>
    tpu.vector_store %arg12[%c0_3, %c0_4], %3 {strides = array<i32>} : memref<64x1152xf32, #tpu.memory_space<vmem>>, vector<64x128xf32>,
    %5 = vector.extract_strided_slice %1 {offsets = [0, 1, 0], sizes = [8, 8, 128], strides = [1, 1, 1]} : vector<9x9x128xf32> to vector<8x8x128xf32>
    %6 = vector.shape_cast %5 : vector<8x8x128xf32> to vector<64x128xf32>
    %c0_5 = arith.constant 0 : index
    %c128 = arith.constant 128 : index
    %7 = vector.load %arg12[%c0_5, %c128] : memref<64x1152xf32, #tpu.memory_space<vmem>>, vector<64x128xf32>
    tpu.vector_store %arg12[%c0_5, %c128], %6 {strides = array<i32>} : memref<64x1152xf32, #tpu.memory_space<vmem>>, vector<64x128xf32>,
    %8 = vector.extract_strided_slice %1 {offsets = [1, 0, 0], sizes = [8, 8, 128], strides = [1, 1, 1]} : vector<9x9x128xf32> to vector<8x8x128xf32>
    %9 = vector.shape_cast %8 : vector<8x8x128xf32> to vector<64x128xf32>
    %c0_6 = arith.constant 0 : index
    %c256 = arith.constant 256 : index
    %10 = vector.load %arg12[%c0_6, %c256] : memref<64x1152xf32, #tpu.memory_space<vmem>>, vector<64x128xf32>
    tpu.vector_store %arg12[%c0_6, %c256], %9 {strides = array<i32>} : memref<64x1152xf32, #tpu.memory_space<vmem>>, vector<64x128xf32>,
    %11 = vector.extract_strided_slice %1 {offsets = [1, 1, 0], sizes = [8, 8, 128], strides = [1, 1, 1]} : vector<9x9x128xf32> to vector<8x8x128xf32>
    %12 = vector.shape_cast %11 : vector<8x8x128xf32> to vector<64x128xf32>
    %c0_7 = arith.constant 0 : index
    %c384 = arith.constant 384 : index
    %13 = vector.load %arg12[%c0_7, %c384] : memref<64x1152xf32, #tpu.memory_space<vmem>>, vector<64x128xf32>
    tpu.vector_store %arg12[%c0_7, %c384], %12 {strides = array<i32>} : memref<64x1152xf32, #tpu.memory_space<vmem>>, vector<64x128xf32>,
    %c0_8 = arith.constant 0 : index
    %c0_9 = arith.constant 0 : index
    %14 = vector.load %arg12[%c0_8, %c0_9] : memref<64x1152xf32, #tpu.memory_space<vmem>>, vector<64x512xf32>
    %c0_10 = arith.constant 0 : index
    %c0_11 = arith.constant 0 : index
    %15 = vector.load %arg2[%c0_10, %c0_11] : memref<512x128xf32, #tpu.memory_space<vmem>>, vector<512x128xf32>
    %cst = arith.constant dense<0.000000e+00> : vector<64x128xf32>
    %16 = tpu.matmul %14, %15, %cst {dimension_numbers = #tpu.dot_dimension_numbers<[1], [0], [0], [1], [0, 0, 1, 1], [], []>} : vector<64x512xf32>, vector<512x128xf32>, vector<64x128xf32> -> vector<64x128xf32>
    %c0_12 = arith.constant 0 : index
    %c0_13 = arith.constant 0 : index
    %17 = vector.load %arg3[%c0_12, %c0_13] : memref<1x128xf32, #tpu.memory_space<vmem>>, vector<1x128xf32>
    %18 = vector.broadcast %17 : vector<1x128xf32> to vector<64x128xf32>
    %19 = arith.addf %16, %18 : vector<64x128xf32>
    %cst_14 = arith.constant 0.000000e+00 : f32
    %20 = vector.broadcast %cst_14 : f32 to vector<64x128xf32>
    %21 = arith.maximumf %19, %20 : vector<64x128xf32>
    %cst_15 = arith.constant 0.000000e+00 : f32
    %22 = vector.broadcast %cst_15 : f32 to vector<10x10x128xf32>
    %c0_16 = arith.constant 0 : index
    %c0_17 = arith.constant 0 : index
    %c0_18 = arith.constant 0 : index
    %23 = vector.load %arg11[%c0_16, %c0_17, %c0_18] : memref<10x10x128xf32, #tpu.memory_space<vmem>>, vector<10x10x128xf32>
    tpu.vector_store %arg11[%c0_16, %c0_17, %c0_18], %22 {strides = array<i32>} : memref<10x10x128xf32, #tpu.memory_space<vmem>>, vector<10x10x128xf32>,
    %c0_i32 = arith.constant 0 : i32
    %c13_i32 = arith.constant 13 : i32
    %24 = arith.addi %c0_i32, %c13_i32 : i32
    %c1_i32 = arith.constant 1 : i32
    %25 = scf.for %arg13 = %c0_i32 to %24 step %c1_i32 iter_args(%arg14 = %21) -> (vector<64x128xf32>)  : i32 {
      %39 = vector.shape_cast %arg14 : vector<64x128xf32> to vector<8x8x128xf32>
      %c1 = arith.constant 1 : index
      %c1_30 = arith.constant 1 : index
      %c0_31 = arith.constant 0 : index
      %40 = vector.load %arg11[%c1, %c1_30, %c0_31] : memref<10x10x128xf32, #tpu.memory_space<vmem>>, vector<8x8x128xf32>
      tpu.vector_store %arg11[%c1, %c1_30, %c0_31], %39 {strides = array<i32>} : memref<10x10x128xf32, #tpu.memory_space<vmem>>, vector<8x8x128xf32>,
      %c0_32 = arith.constant 0 : index
      %c0_33 = arith.constant 0 : index
      %c0_34 = arith.constant 0 : index
      %41 = vector.load %arg11[%c0_32, %c0_33, %c0_34] : memref<10x10x128xf32, #tpu.memory_space<vmem>>, vector<10x10x128xf32>
      %42 = vector.extract_strided_slice %41 {offsets = [0, 0, 0], sizes = [8, 8, 128], strides = [1, 1, 1]} : vector<10x10x128xf32> to vector<8x8x128xf32>
      %43 = vector.shape_cast %42 : vector<8x8x128xf32> to vector<64x128xf32>
      %c0_35 = arith.constant 0 : index
      %c0_36 = arith.constant 0 : index
      %44 = vector.load %arg12[%c0_35, %c0_36] : memref<64x1152xf32, #tpu.memory_space<vmem>>, vector<64x128xf32>
      tpu.vector_store %arg12[%c0_35, %c0_36], %43 {strides = array<i32>} : memref<64x1152xf32, #tpu.memory_space<vmem>>, vector<64x128xf32>,
      %45 = vector.extract_strided_slice %41 {offsets = [0, 1, 0], sizes = [8, 8, 128], strides = [1, 1, 1]} : vector<10x10x128xf32> to vector<8x8x128xf32>
      %46 = vector.shape_cast %45 : vector<8x8x128xf32> to vector<64x128xf32>
      %c0_37 = arith.constant 0 : index
      %c128_38 = arith.constant 128 : index
      %47 = vector.load %arg12[%c0_37, %c128_38] : memref<64x1152xf32, #tpu.memory_space<vmem>>, vector<64x128xf32>
      tpu.vector_store %arg12[%c0_37, %c128_38], %46 {strides = array<i32>} : memref<64x1152xf32, #tpu.memory_space<vmem>>, vector<64x128xf32>,
      %48 = vector.extract_strided_slice %41 {offsets = [0, 2, 0], sizes = [8, 8, 128], strides = [1, 1, 1]} : vector<10x10x128xf32> to vector<8x8x128xf32>
      %49 = vector.shape_cast %48 : vector<8x8x128xf32> to vector<64x128xf32>
      %c0_39 = arith.constant 0 : index
      %c256_40 = arith.constant 256 : index
      %50 = vector.load %arg12[%c0_39, %c256_40] : memref<64x1152xf32, #tpu.memory_space<vmem>>, vector<64x128xf32>
      tpu.vector_store %arg12[%c0_39, %c256_40], %49 {strides = array<i32>} : memref<64x1152xf32, #tpu.memory_space<vmem>>, vector<64x128xf32>,
      %51 = vector.extract_strided_slice %41 {offsets = [1, 0, 0], sizes = [8, 8, 128], strides = [1, 1, 1]} : vector<10x10x128xf32> to vector<8x8x128xf32>
      %52 = vector.shape_cast %51 : vector<8x8x128xf32> to vector<64x128xf32>
      %c0_41 = arith.constant 0 : index
      %c384_42 = arith.constant 384 : index
      %53 = vector.load %arg12[%c0_41, %c384_42] : memref<64x1152xf32, #tpu.memory_space<vmem>>, vector<64x128xf32>
      tpu.vector_store %arg12[%c0_41, %c384_42], %52 {strides = array<i32>} : memref<64x1152xf32, #tpu.memory_space<vmem>>, vector<64x128xf32>,
      %54 = vector.extract_strided_slice %41 {offsets = [1, 1, 0], sizes = [8, 8, 128], strides = [1, 1, 1]} : vector<10x10x128xf32> to vector<8x8x128xf32>
      %55 = vector.shape_cast %54 : vector<8x8x128xf32> to vector<64x128xf32>
      %c0_43 = arith.constant 0 : index
      %c512 = arith.constant 512 : index
      %56 = vector.load %arg12[%c0_43, %c512] : memref<64x1152xf32, #tpu.memory_space<vmem>>, vector<64x128xf32>
      tpu.vector_store %arg12[%c0_43, %c512], %55 {strides = array<i32>} : memref<64x1152xf32, #tpu.memory_space<vmem>>, vector<64x128xf32>,
      %57 = vector.extract_strided_slice %41 {offsets = [1, 2, 0], sizes = [8, 8, 128], strides = [1, 1, 1]} : vector<10x10x128xf32> to vector<8x8x128xf32>
      %58 = vector.shape_cast %57 : vector<8x8x128xf32> to vector<64x128xf32>
      %c0_44 = arith.constant 0 : index
      %c640 = arith.constant 640 : index
      %59 = vector.load %arg12[%c0_44, %c640] : memref<64x1152xf32, #tpu.memory_space<vmem>>, vector<64x128xf32>
      tpu.vector_store %arg12[%c0_44, %c640], %58 {strides = array<i32>} : memref<64x1152xf32, #tpu.memory_space<vmem>>, vector<64x128xf32>,
      %60 = vector.extract_strided_slice %41 {offsets = [2, 0, 0], sizes = [8, 8, 128], strides = [1, 1, 1]} : vector<10x10x128xf32> to vector<8x8x128xf32>
      %61 = vector.shape_cast %60 : vector<8x8x128xf32> to vector<64x128xf32>
      %c0_45 = arith.constant 0 : index
      %c768 = arith.constant 768 : index
      %62 = vector.load %arg12[%c0_45, %c768] : memref<64x1152xf32, #tpu.memory_space<vmem>>, vector<64x128xf32>
      tpu.vector_store %arg12[%c0_45, %c768], %61 {strides = array<i32>} : memref<64x1152xf32, #tpu.memory_space<vmem>>, vector<64x128xf32>,
      %63 = vector.extract_strided_slice %41 {offsets = [2, 1, 0], sizes = [8, 8, 128], strides = [1, 1, 1]} : vector<10x10x128xf32> to vector<8x8x128xf32>
      %64 = vector.shape_cast %63 : vector<8x8x128xf32> to vector<64x128xf32>
      %c0_46 = arith.constant 0 : index
      %c896 = arith.constant 896 : index
      %65 = vector.load %arg12[%c0_46, %c896] : memref<64x1152xf32, #tpu.memory_space<vmem>>, vector<64x128xf32>
      tpu.vector_store %arg12[%c0_46, %c896], %64 {strides = array<i32>} : memref<64x1152xf32, #tpu.memory_space<vmem>>, vector<64x128xf32>,
      %66 = vector.extract_strided_slice %41 {offsets = [2, 2, 0], sizes = [8, 8, 128], strides = [1, 1, 1]} : vector<10x10x128xf32> to vector<8x8x128xf32>
      %67 = vector.shape_cast %66 : vector<8x8x128xf32> to vector<64x128xf32>
      %c0_47 = arith.constant 0 : index
      %c1024 = arith.constant 1024 : index
      %68 = vector.load %arg12[%c0_47, %c1024] : memref<64x1152xf32, #tpu.memory_space<vmem>>, vector<64x128xf32>
      tpu.vector_store %arg12[%c0_47, %c1024], %67 {strides = array<i32>} : memref<64x1152xf32, #tpu.memory_space<vmem>>, vector<64x128xf32>,
      %c0_48 = arith.constant 0 : index
      %c0_49 = arith.constant 0 : index
      %69 = vector.load %arg12[%c0_48, %c0_49] : memref<64x1152xf32, #tpu.memory_space<vmem>>, vector<64x1152xf32>
      %70 = arith.index_cast %arg13 : i32 to index
      %c0_50 = arith.constant 0 : index
      %c0_51 = arith.constant 0 : index
      %71 = vector.load %arg4[%70, %c0_50, %c0_51] : memref<13x1152x128xf32, #tpu.memory_space<vmem>>, vector<1x1152x128xf32>
      %72 = vector.shape_cast %71 : vector<1x1152x128xf32> to vector<1152x128xf32>
      %cst_52 = arith.constant dense<0.000000e+00> : vector<64x128xf32>
      %73 = tpu.matmul %69, %72, %cst_52 {dimension_numbers = #tpu.dot_dimension_numbers<[1], [0], [0], [1], [0, 0, 1, 1], [], []>} : vector<64x1152xf32>, vector<1152x128xf32>, vector<64x128xf32> -> vector<64x128xf32>
      %74 = arith.index_cast %arg13 : i32 to index
      %c0_53 = arith.constant 0 : index
      %c0_54 = arith.constant 0 : index
      %75 = vector.load %arg5[%74, %c0_53, %c0_54] : memref<13x1x128xf32, #tpu.memory_space<vmem>>, vector<1x1x128xf32>
      %76 = vector.shape_cast %75 : vector<1x1x128xf32> to vector<1x128xf32>
      %77 = vector.broadcast %76 : vector<1x128xf32> to vector<64x128xf32>
      %78 = arith.addf %73, %77 : vector<64x128xf32>
      %cst_55 = arith.constant 0.000000e+00 : f32
      %79 = vector.broadcast %cst_55 : f32 to vector<64x128xf32>
      %80 = arith.maximumf %78, %79 : vector<64x128xf32>
      %81 = arith.index_cast %arg13 : i32 to index
      %c0_56 = arith.constant 0 : index
      %c0_57 = arith.constant 0 : index
      %82 = vector.load %arg6[%81, %c0_56, %c0_57] : memref<13x128x128xf32, #tpu.memory_space<vmem>>, vector<1x128x128xf32>
      %83 = vector.shape_cast %82 : vector<1x128x128xf32> to vector<128x128xf32>
      %cst_58 = arith.constant dense<0.000000e+00> : vector<64x128xf32>
      %84 = tpu.matmul %80, %83, %cst_58 {dimension_numbers = #tpu.dot_dimension_numbers<[1], [0], [0], [1], [0, 0, 1, 1], [], []>} : vector<64x128xf32>, vector<128x128xf32>, vector<64x128xf32> -> vector<64x128xf32>
      %85 = arith.index_cast %arg13 : i32 to index
      %c0_59 = arith.constant 0 : index
      %c0_60 = arith.constant 0 : index
      %86 = vector.load %arg7[%85, %c0_59, %c0_60] : memref<13x1x128xf32, #tpu.memory_space<vmem>>, vector<1x1x128xf32>
      %87 = vector.shape_cast %86 : vector<1x1x128xf32> to vector<1x128xf32>
      %88 = vector.broadcast %87 : vector<1x128xf32> to vector<64x128xf32>
      %89 = arith.addf %84, %88 : vector<64x128xf32>
      %cst_61 = arith.constant 0.000000e+00 : f32
      %90 = vector.broadcast %cst_61 : f32 to vector<64x128xf32>
      %91 = arith.maximumf %89, %90 : vector<64x128xf32>
      scf.yield %91 : vector<64x128xf32>
    }
    %c13_i32_19 = arith.constant 13 : i32
    %cst_20 = arith.constant dense<0.000000e+00> : vector<128xf32>
    %26 = vector.multi_reduction <add>, %25, %cst_20 [0] : vector<64x128xf32> to vector<128xf32>
    %27 = vector.shape_cast %26 : vector<128xf32> to vector<1x128xf32>
    %cst_21 = arith.constant 6.400000e+01 : f32
    %28 = vector.broadcast %cst_21 : f32 to vector<1x128xf32>
    %29 = arith.divf %27, %28 : vector<1x128xf32>
    %c0_22 = arith.constant 0 : index
    %c0_23 = arith.constant 0 : index
    %30 = vector.load %arg8[%c0_22, %c0_23] : memref<128x128xf32, #tpu.memory_space<vmem>>, vector<128x128xf32>
    %cst_24 = arith.constant dense<0.000000e+00> : vector<1x128xf32>
    %31 = tpu.matmul %29, %30, %cst_24 {dimension_numbers = #tpu.dot_dimension_numbers<[1], [0], [0], [1], [0, 0, 1, 1], [], []>} : vector<1x128xf32>, vector<128x128xf32>, vector<1x128xf32> -> vector<1x128xf32>
    %c0_25 = arith.constant 0 : index
    %c0_26 = arith.constant 0 : index
    %32 = vector.load %arg9[%c0_25, %c0_26] : memref<1x128xf32, #tpu.memory_space<vmem>>, vector<1x128xf32>
    %33 = arith.addf %31, %32 : vector<1x128xf32>
    %34 = vector.shape_cast %33 : vector<1x128xf32> to vector<1x128xf32>
    %35 = vector.broadcast %34 : vector<1x128xf32> to vector<8x128xf32>
    %c0_27 = arith.constant 0 : index
    %c0_28 = arith.constant 0 : index
    %c0_29 = arith.constant 0 : index
    %36 = vector.load %arg10[%c0_27, %c0_28, %c0_29] : memref<1x8x128xf32, #tpu.memory_space<vmem>>, vector<1x8x128xf32>
    %37 = vector.shape_cast %36 : vector<1x8x128xf32> to vector<8x128xf32>
    %38 = vector.shape_cast %35 : vector<8x128xf32> to vector<1x8x128xf32>
    tpu.vector_store %arg10[%c0_27, %c0_28, %c0_29], %38 {strides = array<i32>} : memref<1x8x128xf32, #tpu.memory_space<vmem>>, vector<1x8x128xf32>,
    return
  }
  func.func @transform_0(%arg0: i32) -> (i32, i32, i32, i32) {
    %c0_i32 = arith.constant 0 : i32
    %c0_i32_0 = arith.constant 0 : i32
    %c0_i32_1 = arith.constant 0 : i32
    %c0_i32_2 = arith.constant 0 : i32
    return %arg0, %c0_i32, %c0_i32_0, %c0_i32_1 : i32, i32, i32, i32
  }
  func.func @transform_1(%arg0: i32) -> (i32, i32) {
    %c0_i32 = arith.constant 0 : i32
    %c0_i32_0 = arith.constant 0 : i32
    %c0_i32_1 = arith.constant 0 : i32
    return %c0_i32, %c0_i32_0 : i32, i32
  }
  func.func @transform_2(%arg0: i32) -> (i32, i32) {
    %c0_i32 = arith.constant 0 : i32
    %c0_i32_0 = arith.constant 0 : i32
    %c0_i32_1 = arith.constant 0 : i32
    return %c0_i32, %c0_i32_0 : i32, i32
  }
  func.func @transform_3(%arg0: i32) -> (i32, i32, i32) {
    %c0_i32 = arith.constant 0 : i32
    %c0_i32_0 = arith.constant 0 : i32
    %c0_i32_1 = arith.constant 0 : i32
    %c0_i32_2 = arith.constant 0 : i32
    return %c0_i32, %c0_i32_0, %c0_i32_1 : i32, i32, i32
  }
  func.func @transform_4(%arg0: i32) -> (i32, i32, i32) {
    %c0_i32 = arith.constant 0 : i32
    %c0_i32_0 = arith.constant 0 : i32
    %c0_i32_1 = arith.constant 0 : i32
    %c0_i32_2 = arith.constant 0 : i32
    return %c0_i32, %c0_i32_0, %c0_i32_1 : i32, i32, i32
  }
  func.func @transform_5(%arg0: i32) -> (i32, i32, i32) {
    %c0_i32 = arith.constant 0 : i32
    %c0_i32_0 = arith.constant 0 : i32
    %c0_i32_1 = arith.constant 0 : i32
    %c0_i32_2 = arith.constant 0 : i32
    return %c0_i32, %c0_i32_0, %c0_i32_1 : i32, i32, i32
  }
  func.func @transform_6(%arg0: i32) -> (i32, i32, i32) {
    %c0_i32 = arith.constant 0 : i32
    %c0_i32_0 = arith.constant 0 : i32
    %c0_i32_1 = arith.constant 0 : i32
    %c0_i32_2 = arith.constant 0 : i32
    return %c0_i32, %c0_i32_0, %c0_i32_1 : i32, i32, i32
  }
  func.func @transform_7(%arg0: i32) -> (i32, i32) {
    %c0_i32 = arith.constant 0 : i32
    %c0_i32_0 = arith.constant 0 : i32
    %c0_i32_1 = arith.constant 0 : i32
    return %c0_i32, %c0_i32_0 : i32, i32
  }
  func.func @transform_8(%arg0: i32) -> (i32, i32) {
    %c0_i32 = arith.constant 0 : i32
    %c0_i32_0 = arith.constant 0 : i32
    %c0_i32_1 = arith.constant 0 : i32
    return %c0_i32, %c0_i32_0 : i32, i32
  }
  func.func @transform_9(%arg0: i32) -> (i32, i32, i32) {
    %c0_i32 = arith.constant 0 : i32
    %c0_i32_0 = arith.constant 0 : i32
    %c0_i32_1 = arith.constant 0 : i32
    return %arg0, %c0_i32, %c0_i32_0 : i32, i32, i32
  }
}

</mosaic_0001>

<llo_original>
// kernel: mobilenet_pallas.1
$region0: #{mobilenet_pallas.1}
  #allocation0 [shape = 'u32[]', space=smem, size = 0x4, offset = 0x4, fixed_abs, tag = 'smem constant byte address 0x4 - core index']
  #allocation1 [shape = 'u32[144,128]{1,0:T(1,128)}', space=vmem, size = 0x12000, scoped, tag = 'internal scratch']
  #allocation2 [shape = 'f32[10,10,128]{2,1,0:T(8,128)}', space=vmem, size = 0x14000, scoped, tag = 'scratch operand']
  #allocation3 [shape = 'f32[64,1152]{1,0:T(8,128)}', space=vmem, size = 0x48000, scoped, tag = 'scratch operand']
  %s0 = inlined_call_operand.vmem [shape: f32[2,9,9,128], index: 0, kind: input, shape index: {}]
  %s1 = inlined_call_operand.hbm [shape: f32[512,128], index: 1, kind: input, shape index: {}]
  %s2 = inlined_call_operand.hbm [shape: f32[1,128], index: 2, kind: input, shape index: {}]
  %s3 = inlined_call_operand.hbm [shape: f32[13,1152,128], index: 3, kind: input, shape index: {}]
  %s4 = inlined_call_operand.hbm [shape: f32[13,1,128], index: 4, kind: input, shape index: {}]
  %s5 = inlined_call_operand.hbm [shape: f32[13,128,128], index: 5, kind: input, shape index: {}]
  %s6 = inlined_call_operand.hbm [shape: f32[13,1,128], index: 6, kind: input, shape index: {}]
  %s7 = inlined_call_operand.hbm [shape: f32[128,128], index: 7, kind: input, shape index: {}]
  %s8 = inlined_call_operand.hbm [shape: f32[1,128], index: 8, kind: input, shape index: {}]
  %s9 = inlined_call_operand.vmem [shape: f32[2,8,128], index: 9, kind: output, shape index: {}]
  %s10 = sld [smem:[#allocation0]]
  $region108: #{mobilenet_pallas.1} parent=0
    _
  %s12 = ssub.s32 1, %s10
  %s13 = scalar_select 0, %s12, %s10
  $region1: #{mobilenet_pallas.1} parent=0
    #allocation4 [shape = 'u8[262144]{0}', space=vmem, size = 0x40000, scoped, tag = 'input window, operand 1, single buffered']
    #allocation5 [shape = 's32[2]{0}', space=sflag, size = 0x8, scoped, tag = 'scoped memory for mobilenet_pallas.1']
    #allocation6 [shape = 'u8[512]{0}', space=vmem, size = 0x400, scoped, tag = 'input window, operand 2, single buffered']
    #allocation7 [shape = 's32[1]{0}', space=sflag, size = 0x4, scoped, tag = 'scoped memory for mobilenet_pallas.1']
    #allocation8 [shape = 'u8[7667712]{0}', space=vmem, size = 0x750000, scoped, tag = 'input window, operand 3, single buffered']
    #allocation9 [shape = 'u8[6656]{0}', space=vmem, size = 0x1c00, scoped, tag = 'input window, operand 4, single buffered']
    #allocation10 [shape = 's32[1]{0}', space=sflag, size = 0x4, scoped, tag = 'scoped memory for mobilenet_pallas.1']
    #allocation11 [shape = 'u8[851968]{0}', space=vmem, size = 0xd0000, scoped, tag = 'input window, operand 5, single buffered']
    #allocation12 [shape = 'u8[6656]{0}', space=vmem, size = 0x1c00, scoped, tag = 'input window, operand 6, single buffered']
    #allocation13 [shape = 's32[1]{0}', space=sflag, size = 0x4, scoped, tag = 'scoped memory for mobilenet_pallas.1']
    #allocation14 [shape = 'u8[65536]{0}', space=vmem, size = 0x10000, scoped, tag = 'input window, operand 7, single buffered']
    #allocation15 [shape = 'u8[512]{0}', space=vmem, size = 0x400, scoped, tag = 'input window, operand 8, single buffered']
    #allocation16 [shape = 's32[1]{0}', space=sflag, size = 0x4, scoped, tag = 'scoped memory for mobilenet_pallas.1']
    %14 = vsyncpa [#allocation5], 0
    %15 = vsyncpa [#allocation7], 0
    %16 = vsyncpa [#allocation10], 0
    %17 = vsyncpa [#allocation13], 0
    %18 = vsyncpa [#allocation16], 0
    loop: start=0, step=1, limit=4
    $region2: #{mobilenet_pallas.1} parent=1 // loop_pre_header
      _
    $region3: #{mobilenet_pallas.1} parent=1 // loop_header
      %s20 = sphi 0, %s24
      %p21 = scmp.ge.s32.totalorder %s20, 4
      %s30 = sphi 0, %s32
      %s33 = sphi 0, %s30
      %s34 = sphi 0, %s33
      %s50 = sphi 0, %s34
      %s54 = sphi 0, %s54
      %s56 = sphi 0, %s54
      %s57 = sphi 0, %s56
      %s71 = sphi 0, %s57
      %s75 = sphi 0, %s75
      %s77 = sphi 0, %s75
      %s78 = sphi 0, %s77
      %s92 = sphi 0, %s78
      %s96 = sphi 0, %s96
      %s98 = sphi 0, %s96
      %s99 = sphi 0, %s98
      %s113 = sphi 0, %s99
      %s117 = sphi 0, %s117
      %s119 = sphi 0, %s117
      %s120 = sphi 0, %s119
      %s134 = sphi 0, %s120
      %s138 = sphi 0, %s138
      %s140 = sphi 0, %s138
      %s141 = sphi 0, %s140
      %s155 = sphi 0, %s141
      %s159 = sphi 0, %s159
      %s161 = sphi 0, %s159
      %s162 = sphi 0, %s161
      %s176 = sphi 0, %s162
      %s180 = sphi 0, %s180
      %s182 = sphi 0, %s180
      %s183 = sphi 0, %s182
      %s197 = sphi 0, %s183
      %s201 = sphi 0, %s201
      %s203 = sphi 0, %s201
      %s204 = sphi 0, %s203
      %s218 = sphi 0, %s204
      %s224 = sphi 0, %s226
      %s227 = sphi 0, %s224
      %s228 = sphi 0, %s227
      %s244 = sphi 0, %s228
    $region4: #{mobilenet_pallas.1} parent=1 // loop_header_branch
      %23 = sbr.rel (%p21) target = $region8
    $region5: #{mobilenet_pallas.1} parent=1 // loop_body
      %s25 = ssub.s32 %s20, 1
      %s26 = ssub.s32 %s20, 2
      %s27 = sadd.s32 %s20, 1
      %s28 = ssub.s32 %s20, %s27
      %p29 = scmp.eq.s32.totalorder %s28, 0
      %s31 = sadd.s32 %s30, 1
      %s32 = scalar_select %p29, %s30, %s31
      %p35 = pneg %p29
      %p36 = scmp.eq.s32.totalorder %s20, 1
      %p37 = por %p35, %p36
      %p38 = scmp.ne.s32.totalorder %s30, %s33
      %p39 = scmp.eq.s32.totalorder %s20, 0
      %p40 = por %p38, %p39
      %p41 = scmp.ne.s32.totalorder %s30, %s33
      %p42 = scmp.eq.s32.totalorder %s25, 1
      %p43 = por %p41, %p42
      %p44 = scmp.ne.s32.totalorder %s33, %s34
      %p45 = scmp.eq.s32.totalorder %s25, 0
      %p46 = por %p44, %p45
      %p47 = scmp.ne.s32.totalorder %s33, %s34
      %p48 = scmp.eq.s32.totalorder %s26, 1
      %p49 = por %p47, %p48
      %p51 = scmp.ne.s32.totalorder %s34, %s50
      %p52 = scmp.eq.s32.totalorder %s26, 0
      %p53 = por %p51, %p52
      %s55 = sadd.s32 %s54, 1
      %p58 = scmp.eq.s32.totalorder %s20, 1
      %p59 = scmp.ne.s32.totalorder %s54, %s56
      %p60 = scmp.eq.s32.totalorder %s20, 0
      %p61 = por %p59, %p60
      %p62 = scmp.ne.s32.totalorder %s54, %s56
      %p63 = scmp.eq.s32.totalorder %s25, 1
      %p64 = por %p62, %p63
      %p65 = scmp.ne.s32.totalorder %s56, %s57
      %p66 = scmp.eq.s32.totalorder %s25, 0
      %p67 = por %p65, %p66
      %p68 = scmp.ne.s32.totalorder %s56, %s57
      %p69 = scmp.eq.s32.totalorder %s26, 1
      %p70 = por %p68, %p69
      %p72 = scmp.ne.s32.totalorder %s57, %s71
      %p73 = scmp.eq.s32.totalorder %s26, 0
      %p74 = por %p72, %p73
      %s76 = sadd.s32 %s75, 1
      %p79 = scmp.eq.s32.totalorder %s20, 1
      %p80 = scmp.ne.s32.totalorder %s75, %s77
      %p81 = scmp.eq.s32.totalorder %s20, 0
      %p82 = por %p80, %p81
      %p83 = scmp.ne.s32.totalorder %s75, %s77
      %p84 = scmp.eq.s32.totalorder %s25, 1
      %p85 = por %p83, %p84
      %p86 = scmp.ne.s32.totalorder %s77, %s78
      %p87 = scmp.eq.s32.totalorder %s25, 0
      %p88 = por %p86, %p87
      %p89 = scmp.ne.s32.totalorder %s77, %s78
      %p90 = scmp.eq.s32.totalorder %s26, 1
      %p91 = por %p89, %p90
      %p93 = scmp.ne.s32.totalorder %s78, %s92
      %p94 = scmp.eq.s32.totalorder %s26, 0
      %p95 = por %p93, %p94
      %s97 = sadd.s32 %s96, 1
      %p100 = scmp.eq.s32.totalorder %s20, 1
      %p101 = scmp.ne.s32.totalorder %s96, %s98
      %p102 = scmp.eq.s32.totalorder %s20, 0
      %p103 = por %p101, %p102
      %p104 = scmp.ne.s32.totalorder %s96, %s98
      %p105 = scmp.eq.s32.totalorder %s25, 1
      %p106 = por %p104, %p105
      %p107 = scmp.ne.s32.totalorder %s98, %s99
      %p108 = scmp.eq.s32.totalorder %s25, 0
      %p109 = por %p107, %p108
      %p110 = scmp.ne.s32.totalorder %s98, %s99
      %p111 = scmp.eq.s32.totalorder %s26, 1
      %p112 = por %p110, %p111
      %p114 = scmp.ne.s32.totalorder %s99, %s113
      %p115 = scmp.eq.s32.totalorder %s26, 0
      %p116 = por %p114, %p115
      %s118 = sadd.s32 %s117, 1
      %p121 = scmp.eq.s32.totalorder %s20, 1
      %p122 = scmp.ne.s32.totalorder %s117, %s119
      %p123 = scmp.eq.s32.totalorder %s20, 0
      %p124 = por %p122, %p123
      %p125 = scmp.ne.s32.totalorder %s117, %s119
      %p126 = scmp.eq.s32.totalorder %s25, 1
      %p127 = por %p125, %p126
      %p128 = scmp.ne.s32.totalorder %s119, %s120
      %p129 = scmp.eq.s32.totalorder %s25, 0
      %p130 = por %p128, %p129
      %p131 = scmp.ne.s32.totalorder %s119, %s120
      %p132 = scmp.eq.s32.totalorder %s26, 1
      %p133 = por %p131, %p132
      %p135 = scmp.ne.s32.totalorder %s120, %s134
      %p136 = scmp.eq.s32.totalorder %s26, 0
      %p137 = por %p135, %p136
      %s139 = sadd.s32 %s138, 1
      %p142 = scmp.eq.s32.totalorder %s20, 1
      %p143 = scmp.ne.s32.totalorder %s138, %s140
      %p144 = scmp.eq.s32.totalorder %s20, 0
      %p145 = por %p143, %p144
      %p146 = scmp.ne.s32.totalorder %s138, %s140
      %p147 = scmp.eq.s32.totalorder %s25, 1
      %p148 = por %p146, %p147
      %p149 = scmp.ne.s32.totalorder %s140, %s141
      %p150 = scmp.eq.s32.totalorder %s25, 0
      %p151 = por %p149, %p150
      %p152 = scmp.ne.s32.totalorder %s140, %s141
      %p153 = scmp.eq.s32.totalorder %s26, 1
      %p154 = por %p152, %p153
      %p156 = scmp.ne.s32.totalorder %s141, %s155
      %p157 = scmp.eq.s32.totalorder %s26, 0
      %p158 = por %p156, %p157
      %s160 = sadd.s32 %s159, 1
      %p163 = scmp.eq.s32.totalorder %s20, 1
      %p164 = scmp.ne.s32.totalorder %s159, %s161
      %p165 = scmp.eq.s32.totalorder %s20, 0
      %p166 = por %p164, %p165
      %p167 = scmp.ne.s32.totalorder %s159, %s161
      %p168 = scmp.eq.s32.totalorder %s25, 1
      %p169 = por %p167, %p168
      %p170 = scmp.ne.s32.totalorder %s161, %s162
      %p171 = scmp.eq.s32.totalorder %s25, 0
      %p172 = por %p170, %p171
      %p173 = scmp.ne.s32.totalorder %s161, %s162
      %p174 = scmp.eq.s32.totalorder %s26, 1
      %p175 = por %p173, %p174
      %p177 = scmp.ne.s32.totalorder %s162, %s176
      %p178 = scmp.eq.s32.totalorder %s26, 0
      %p179 = por %p177, %p178
      %s181 = sadd.s32 %s180, 1
      %p184 = scmp.eq.s32.totalorder %s20, 1
      %p185 = scmp.ne.s32.totalorder %s180, %s182
      %p186 = scmp.eq.s32.totalorder %s20, 0
      %p187 = por %p185, %p186
      %p188 = scmp.ne.s32.totalorder %s180, %s182
      %p189 = scmp.eq.s32.totalorder %s25, 1
      %p190 = por %p188, %p189
      %p191 = scmp.ne.s32.totalorder %s182, %s183
      %p192 = scmp.eq.s32.totalorder %s25, 0
      %p193 = por %p191, %p192
      %p194 = scmp.ne.s32.totalorder %s182, %s183
      %p195 = scmp.eq.s32.totalorder %s26, 1
      %p196 = por %p194, %p195
      %p198 = scmp.ne.s32.totalorder %s183, %s197
      %p199 = scmp.eq.s32.totalorder %s26, 0
      %p200 = por %p198, %p199
      %s202 = sadd.s32 %s201, 1
      %p205 = scmp.eq.s32.totalorder %s20, 1
      %p206 = scmp.ne.s32.totalorder %s201, %s203
      %p207 = scmp.eq.s32.totalorder %s20, 0
      %p208 = por %p206, %p207
      %p209 = scmp.ne.s32.totalorder %s201, %s203
      %p210 = scmp.eq.s32.totalorder %s25, 1
      %p211 = por %p209, %p210
      %p212 = scmp.ne.s32.totalorder %s203, %s204
      %p213 = scmp.eq.s32.totalorder %s25, 0
      %p214 = por %p212, %p213
      %p215 = scmp.ne.s32.totalorder %s203, %s204
      %p216 = scmp.eq.s32.totalorder %s26, 1
      %p217 = por %p215, %p216
      %p219 = scmp.ne.s32.totalorder %s204, %s218
      %p220 = scmp.eq.s32.totalorder %s26, 0
      %p221 = por %p219, %p220
      %s222 = ssub.s32 %s20, %s27
      %p223 = scmp.eq.s32.totalorder %s222, 0
      %s225 = sadd.s32 %s224, 1
      %s226 = scalar_select %p223, %s224, %s225
      %p229 = pneg %p223
      %p230 = scmp.eq.s32.totalorder %s20, 1
      %p231 = por %p229, %p230
      %p232 = scmp.ne.s32.totalorder %s224, %s227
      %p233 = scmp.eq.s32.totalorder %s20, 0
      %p234 = por %p232, %p233
      %p235 = scmp.ne.s32.totalorder %s224, %s227
      %p236 = scmp.eq.s32.totalorder %s25, 1
      %p237 = por %p235, %p236
      %p238 = scmp.ne.s32.totalorder %s227, %s228
      %p239 = scmp.eq.s32.totalorder %s25, 0
      %p240 = por %p238, %p239
      %p241 = scmp.ne.s32.totalorder %s227, %s228
      %p242 = scmp.eq.s32.totalorder %s26, 1
      %p243 = por %p241, %p242
      %p245 = scmp.ne.s32.totalorder %s228, %s244
      %p246 = scmp.eq.s32.totalorder %s26, 0
      %p247 = por %p245, %p246
      %p248 = scmp.le.s32.totalorder 1, %s20
      %p249 = scmp.lt.s32.totalorder %s20, 3
      %p250 = pnand %p248, %p249
      %p251 = pneg %p250
      // Predicated region
      $region9: #{mobilenet_pallas.1} parent=5 // pred_check
        _
      $region10: #{mobilenet_pallas.1} parent=5 // pred_check_branch
        %253 = sbr.rel (%p250) target = $region12
      $region11: #{mobilenet_pallas.1} parent=5 // pred_region
        %s254 = ssub.s32 %s20, 1
        // Predicated region
        $region13: #{mobilenet_pallas.1} parent=11 // pred_check
          %p255 = pneg %p67
        $region14: #{mobilenet_pallas.1} parent=11 // pred_check_branch
          %257 = sbr.rel (%p255) target = $region16
        $region15: #{mobilenet_pallas.1} parent=11 // pred_region
          %s259 = ssub.s32 8192, 8192
          %260 = vsyncadd [#allocation5], %s259
          %s261 = sshll.u32 [#allocation4], 4
          %s262 = int_to_ptr.vmem [resolvable:$true] %s261
          %267 = dma.hbm_to_vmem [thread:$0]  %s1, 8192, %s262, [#allocation5], 128, 128, 8
        $region16: #{mobilenet_pallas.1} parent=11 // pred_fallthru
          _
        // Predicated region
        $region17: #{mobilenet_pallas.1} parent=11 // pred_check
          %p268 = pneg %p88
        $region18: #{mobilenet_pallas.1} parent=11 // pred_check_branch
          %270 = sbr.rel (%p268) target = $region20
        $region19: #{mobilenet_pallas.1} parent=11 // pred_region
          %s272 = ssub.s32 16, 16
          %273 = vsyncadd [#allocation7], %s272
          %s275 = sshll.u32 [#allocation6], 4
          %s276 = int_to_ptr.vmem [resolvable:$true] %s275
          %278 = dma.hbm_to_vmem [thread:$0]  %s2, 16, %s276, [#allocation7]
        $region20: #{mobilenet_pallas.1} parent=11 // pred_fallthru
          _
        // Predicated region
        $region21: #{mobilenet_pallas.1} parent=11 // pred_check
          %p279 = pneg %p109
        $region22: #{mobilenet_pallas.1} parent=11 // pred_check_branch
          %281 = sbr.rel (%p279) target = $region24
        $region23: #{mobilenet_pallas.1} parent=11 // pred_region
          %s283 = ssub.s32 239616, 239616
          %284 = vsyncadd [#allocation7], %s283
          %s285 = sshll.u32 [#allocation8], 4
          %s286 = int_to_ptr.vmem [resolvable:$true] %s285
          %291 = dma.hbm_to_vmem [thread:$0]  %s3, 239616, %s286, [#allocation7], 128, 128, 8
        $region24: #{mobilenet_pallas.1} parent=11 // pred_fallthru
          _
        // Predicated region
        $region25: #{mobilenet_pallas.1} parent=11 // pred_check
          %p292 = pneg %p130
        $region26: #{mobilenet_pallas.1} parent=11 // pred_check_branch
          %294 = sbr.rel (%p292) target = $region28
        $region27: #{mobilenet_pallas.1} parent=11 // pred_region
          %s296 = ssub.s32 208, 208
          %297 = vsyncadd [#allocation10], %s296
          %s298 = sshll.u32 [#allocation9], 4
          %s299 = int_to_ptr.vmem [resolvable:$true] %s298
          %304 = dma.hbm_to_vmem [thread:$0]  %s4, 208, %s299, [#allocation10], 16, 16, 1
        $region28: #{mobilenet_pallas.1} parent=11 // pred_fallthru
          _
        // Predicated region
        $region29: #{mobilenet_pallas.1} parent=11 // pred_check
          %p305 = pneg %p151
        $region30: #{mobilenet_pallas.1} parent=11 // pred_check_branch
          %307 = sbr.rel (%p305) target = $region32
        $region31: #{mobilenet_pallas.1} parent=11 // pred_region
          %s309 = ssub.s32 26624, 26624
          %310 = vsyncadd [#allocation10], %s309
          %s311 = sshll.u32 [#allocation11], 4
          %s312 = int_to_ptr.vmem [resolvable:$true] %s311
          %317 = dma.hbm_to_vmem [thread:$0]  %s5, 26624, %s312, [#allocation10], 128, 128, 8
        $region32: #{mobilenet_pallas.1} parent=11 // pred_fallthru
          _
        // Predicated region
        $region33: #{mobilenet_pallas.1} parent=11 // pred_check
          %p318 = pneg %p172
        $region34: #{mobilenet_pallas.1} parent=11 // pred_check_branch
          %320 = sbr.rel (%p318) target = $region36
        $region35: #{mobilenet_pallas.1} parent=11 // pred_region
          %s322 = ssub.s32 208, 208
          %323 = vsyncadd [#allocation13], %s322
          %s324 = sshll.u32 [#allocation12], 4
          %s325 = int_to_ptr.vmem [resolvable:$true] %s324
          %330 = dma.hbm_to_vmem [thread:$0]  %s6, 208, %s325, [#allocation13], 16, 16, 1
        $region36: #{mobilenet_pallas.1} parent=11 // pred_fallthru
          _
        // Predicated region
        $region37: #{mobilenet_pallas.1} parent=11 // pred_check
          %p331 = pneg %p193
        $region38: #{mobilenet_pallas.1} parent=11 // pred_check_branch
          %333 = sbr.rel (%p331) target = $region40
        $region39: #{mobilenet_pallas.1} parent=11 // pred_region
          %s335 = ssub.s32 2048, 2048
          %336 = vsyncadd [#allocation13], %s335
          %s337 = sshll.u32 [#allocation14], 4
          %s338 = int_to_ptr.vmem [resolvable:$true] %s337
          %343 = dma.hbm_to_vmem [thread:$0]  %s7, 2048, %s338, [#allocation13], 128, 128, 8
        $region40: #{mobilenet_pallas.1} parent=11 // pred_fallthru
          _
        // Predicated region
        $region41: #{mobilenet_pallas.1} parent=11 // pred_check
          %p344 = pneg %p214
        $region42: #{mobilenet_pallas.1} parent=11 // pred_check_branch
          %346 = sbr.rel (%p344) target = $region44
        $region43: #{mobilenet_pallas.1} parent=11 // pred_region
          %s348 = ssub.s32 16, 16
          %349 = vsyncadd [#allocation16], %s348
          %s351 = sshll.u32 [#allocation15], 4
          %s352 = int_to_ptr.vmem [resolvable:$true] %s351
          %354 = dma.hbm_to_vmem [thread:$0]  %s8, 16, %s352, [#allocation16]
        $region44: #{mobilenet_pallas.1} parent=11 // pred_fallthru
          _
      $region12: #{mobilenet_pallas.1} parent=5 // pred_fallthru
        _
      %p355 = scmp.lt.s32.totalorder %s20, 2
      // Predicated region
      $region45: #{mobilenet_pallas.1} parent=5 // pred_check
        %p356 = pneg %p355
      $region46: #{mobilenet_pallas.1} parent=5 // pred_check_branch
        %358 = sbr.rel (%p356) target = $region48
      $region47: #{mobilenet_pallas.1} parent=5 // pred_region
        // Predicated region
        $region49: #{mobilenet_pallas.1} parent=47 // pred_check
          %p359 = pneg %p40
        $region50: #{mobilenet_pallas.1} parent=47 // pred_check_branch
          %361 = sbr.rel (%p359) target = $region52
        $region51: #{mobilenet_pallas.1} parent=47 // pred_region
          %p362 = scmp.lt.s32.totalorder %s20, 1
          %s363 = scalar_select %p362, %s20, 1
          %s364 = smul.addr %s363, 18
          %s365 = smul.addr %s364, 8
          %s366 = scalar_lea.vmem %s0, %s365
        $region52: #{mobilenet_pallas.1} parent=47 // pred_fallthru
          _
      $region48: #{mobilenet_pallas.1} parent=5 // pred_fallthru
        _
      %p367 = scmp.le.s32.totalorder 1, %s20
      %p368 = scmp.lt.s32.totalorder %s20, 3
      %p369 = pnand %p367, %p368
      %p370 = pneg %p369
      // Predicated region
      $region53: #{mobilenet_pallas.1} parent=5 // pred_check
        _
      $region54: #{mobilenet_pallas.1} parent=5 // pred_check_branch
        %372 = sbr.rel (%p369) target = $region56
      $region55: #{mobilenet_pallas.1} parent=5 // pred_region
        %s373 = ssub.s32 %s20, 1
        // Predicated region
        $region57: #{mobilenet_pallas.1} parent=55 // pred_check
          %p374 = pneg %p67
        $region58: #{mobilenet_pallas.1} parent=55 // pred_check_branch
          %376 = sbr.rel (%p374) target = $region60
        $region59: #{mobilenet_pallas.1} parent=55 // pred_region
          %377 = dma.done [#allocation5], 8192
        $region60: #{mobilenet_pallas.1} parent=55 // pred_fallthru
          _
        // Predicated region
        $region61: #{mobilenet_pallas.1} parent=55 // pred_check
          %p378 = pneg %p88
        $region62: #{mobilenet_pallas.1} parent=55 // pred_check_branch
          %380 = sbr.rel (%p378) target = $region64
        $region63: #{mobilenet_pallas.1} parent=55 // pred_region
          %381 = dma.done [#allocation7], 16
        $region64: #{mobilenet_pallas.1} parent=55 // pred_fallthru
          _
        // Predicated region
        $region65: #{mobilenet_pallas.1} parent=55 // pred_check
          %p382 = pneg %p109
        $region66: #{mobilenet_pallas.1} parent=55 // pred_check_branch
          %384 = sbr.rel (%p382) target = $region68
        $region67: #{mobilenet_pallas.1} parent=55 // pred_region
          %385 = dma.done [#allocation7], 239616
        $region68: #{mobilenet_pallas.1} parent=55 // pred_fallthru
          _
        // Predicated region
        $region69: #{mobilenet_pallas.1} parent=55 // pred_check
          %p386 = pneg %p130
        $region70: #{mobilenet_pallas.1} parent=55 // pred_check_branch
          %388 = sbr.rel (%p386) target = $region72
        $region71: #{mobilenet_pallas.1} parent=55 // pred_region
          %389 = dma.done [#allocation10], 208
        $region72: #{mobilenet_pallas.1} parent=55 // pred_fallthru
          _
        // Predicated region
        $region73: #{mobilenet_pallas.1} parent=55 // pred_check
          %p390 = pneg %p151
        $region74: #{mobilenet_pallas.1} parent=55 // pred_check_branch
          %392 = sbr.rel (%p390) target = $region76
        $region75: #{mobilenet_pallas.1} parent=55 // pred_region
          %393 = dma.done [#allocation10], 26624
        $region76: #{mobilenet_pallas.1} parent=55 // pred_fallthru
          _
        // Predicated region
        $region77: #{mobilenet_pallas.1} parent=55 // pred_check
          %p394 = pneg %p172
        $region78: #{mobilenet_pallas.1} parent=55 // pred_check_branch
          %396 = sbr.rel (%p394) target = $region80
        $region79: #{mobilenet_pallas.1} parent=55 // pred_region
          %397 = dma.done [#allocation13], 208
        $region80: #{mobilenet_pallas.1} parent=55 // pred_fallthru
          _
        // Predicated region
        $region81: #{mobilenet_pallas.1} parent=55 // pred_check
          %p398 = pneg %p193
        $region82: #{mobilenet_pallas.1} parent=55 // pred_check_branch
          %400 = sbr.rel (%p398) target = $region84
        $region83: #{mobilenet_pallas.1} parent=55 // pred_region
          %401 = dma.done [#allocation13], 2048
        $region84: #{mobilenet_pallas.1} parent=55 // pred_fallthru
          _
        // Predicated region
        $region85: #{mobilenet_pallas.1} parent=55 // pred_check
          %p402 = pneg %p214
        $region86: #{mobilenet_pallas.1} parent=55 // pred_check_branch
          %404 = sbr.rel (%p402) target = $region88
        $region87: #{mobilenet_pallas.1} parent=55 // pred_region
          %405 = dma.done [#allocation16], 16
        $region88: #{mobilenet_pallas.1} parent=55 // pred_fallthru
          _
        %p406 = scmp.lt.s32.totalorder %s25, 1
        %s407 = scalar_select %p406, %s25, 1
        %s408 = smul.addr %s407, 18
        %s409 = smul.addr %s408, 8
        %s410 = scalar_lea.vmem %s0, %s409
        %p411 = pneg %p46
        %p412 = pneg %p43
        %p413 = pneg %p67
        %p414 = pneg %p64
        %p415 = pneg %p88
        %p416 = pneg %p85
        %p417 = pneg %p109
        %p418 = pneg %p106
        %p419 = pneg %p130
        %p420 = pneg %p127
        %p421 = pneg %p151
        %p422 = pneg %p148
        %p423 = pneg %p172
        %p424 = pneg %p169
        %p425 = pneg %p193
        %p426 = pneg %p190
        %p427 = pneg %p214
        %p428 = pneg %p211
        %p429 = pneg %p240
        %p430 = pneg %p237
        %p431 = scmp.lt.s32.totalorder %s25, 1
        %s432 = scalar_select %p431, %s25, 1
        %s433 = smul.addr %s432, 8
        %s434 = scalar_lea.vmem %s9, %s433
        %p435 = scmp.lt.s32.totalorder %s25, 1
        %s436 = scalar_select %p435, %s25, 1
        %s437 = smul.addr %s436, 18
        %s438 = smul.addr %s437, 8
        %s439 = scalar_lea.vmem %s0, %s438
        %p440 = scmp.lt.s32.totalorder %s25, 1
        %s441 = scalar_select %p440, %s25, 1
        %s442 = smul.addr %s441, 8
        %s443 = scalar_lea.vmem %s9, %s442
        %v444 = vld [vmem:[%s439] sm:$0xff]
        %v445 = vld [vmem:[%s439 + $0x8] sm:$0x1]
        %v446 = vld [vmem:[%s439 + $0x10] sm:$0xff]
        %v447 = vld [vmem:[%s439 + $0x18] sm:$0x1]
        %v448 = vld [vmem:[%s439 + $0x20] sm:$0xff]
        %v449 = vld [vmem:[%s439 + $0x28] sm:$0x1]
        %v450 = vld [vmem:[%s439 + $0x30] sm:$0xff]
        %v451 = vld [vmem:[%s439 + $0x38] sm:$0x1]
        %v452 = vld [vmem:[%s439 + $0x40] sm:$0xff]
        %v453 = vld [vmem:[%s439 + $0x48] sm:$0x1]
        %v454 = vld [vmem:[%s439 + $0x50] sm:$0xff]
        %v455 = vld [vmem:[%s439 + $0x58] sm:$0x1]
        %v456 = vld [vmem:[%s439 + $0x60] sm:$0xff]
        %v457 = vld [vmem:[%s439 + $0x68] sm:$0x1]
        %v458 = vld [vmem:[%s439 + $0x70] sm:$0xff]
        %v459 = vld [vmem:[%s439 + $0x78] sm:$0x1]
        %v460 = vld [vmem:[%s439 + $0x80] sm:$0xff]
        %v461 = vld [vmem:[%s439 + $0x88] sm:$0x1]
        %462 = vst [vmem:[#allocation3] sm:$0xff] %v444
        %463 = vst [vmem:[#allocation3 + $0x48] sm:$0xff] %v446
        %464 = vst [vmem:[#allocation3 + $0x90] sm:$0xff] %v448
        %465 = vst [vmem:[#allocation3 + $0xd8] sm:$0xff] %v450
        %466 = vst [vmem:[#allocation3 + $0x120] sm:$0xff] %v452
        %467 = vst [vmem:[#allocation3 + $0x168] sm:$0xff] %v454
        %468 = vst [vmem:[#allocation3 + $0x1b0] sm:$0xff] %v456
        %469 = vst [vmem:[#allocation3 + $0x1f8] sm:$0xff] %v458
        %vm486 = vcmask 1046528
        %v487 = vrot.slane %v444, 1
        %v488 = vrot.slane %v445, 1
        %v489 = vsel %vm486, %v487, %v488
        %v490 = vrot.slane %v446, 1
        %v491 = vrot.slane %v447, 1
        %v492 = vsel %vm486, %v490, %v491
        %v493 = vrot.slane %v448, 1
        %v494 = vrot.slane %v449, 1
        %v495 = vsel %vm486, %v493, %v494
        %v496 = vrot.slane %v450, 1
        %v497 = vrot.slane %v451, 1
        %v498 = vsel %vm486, %v496, %v497
        %v499 = vrot.slane %v452, 1
        %v500 = vrot.slane %v453, 1
        %v501 = vsel %vm486, %v499, %v500
        %v502 = vrot.slane %v454, 1
        %v503 = vrot.slane %v455, 1
        %v504 = vsel %vm486, %v502, %v503
        %v505 = vrot.slane %v456, 1
        %v506 = vrot.slane %v457, 1
        %v507 = vsel %vm486, %v505, %v506
        %v508 = vrot.slane %v458, 1
        %v509 = vrot.slane %v459, 1
        %v510 = vsel %vm486, %v508, %v509
        %519 = vst [vmem:[#allocation3 + $0x8] sm:$0xff] %v489
        %520 = vst [vmem:[#allocation3 + $0x50] sm:$0xff] %v492
        %521 = vst [vmem:[#allocation3 + $0x98] sm:$0xff] %v495
        %522 = vst [vmem:[#allocation3 + $0xe0] sm:$0xff] %v498
        %523 = vst [vmem:[#allocation3 + $0x128] sm:$0xff] %v501
        %524 = vst [vmem:[#allocation3 + $0x170] sm:$0xff] %v504
        %525 = vst [vmem:[#allocation3 + $0x1b8] sm:$0xff] %v507
        %526 = vst [vmem:[#allocation3 + $0x200] sm:$0xff] %v510
        %527 = vst [vmem:[#allocation3 + $0x10] sm:$0xff] %v446
        %528 = vst [vmem:[#allocation3 + $0x58] sm:$0xff] %v448
        %529 = vst [vmem:[#allocation3 + $0xa0] sm:$0xff] %v450
        %530 = vst [vmem:[#allocation3 + $0xe8] sm:$0xff] %v452
        %531 = vst [vmem:[#allocation3 + $0x130] sm:$0xff] %v454
        %532 = vst [vmem:[#allocation3 + $0x178] sm:$0xff] %v456
        %533 = vst [vmem:[#allocation3 + $0x1c0] sm:$0xff] %v458
        %534 = vst [vmem:[#allocation3 + $0x208] sm:$0xff] %v460
        %v537 = vrot.slane %v460, 1
        %v538 = vrot.slane %v461, 1
        %v539 = vsel %vm486, %v537, %v538
        %541 = vst [vmem:[#allocation3 + $0x18] sm:$0xff] %v492
        %542 = vst [vmem:[#allocation3 + $0x60] sm:$0xff] %v495
        %543 = vst [vmem:[#allocation3 + $0xa8] sm:$0xff] %v498
        %544 = vst [vmem:[#allocation3 + $0xf0] sm:$0xff] %v501
        %545 = vst [vmem:[#allocation3 + $0x138] sm:$0xff] %v504
        %546 = vst [vmem:[#allocation3 + $0x180] sm:$0xff] %v507
        %547 = vst [vmem:[#allocation3 + $0x1c8] sm:$0xff] %v510
        %548 = vst [vmem:[#allocation3 + $0x210] sm:$0xff] %v539
        %v549 = vld [vmem:[#allocation3] sm:$0xff]
        %v550 = vld [vmem:[#allocation3 + $0x8] sm:$0xff]
        %v551 = vld [vmem:[#allocation3 + $0x10] sm:$0xff]
        %v552 = vld [vmem:[#allocation3 + $0x18] sm:$0xff]
        %v553 = vld [vmem:[#allocation3 + $0x48] sm:$0xff]
        %v554 = vld [vmem:[#allocation3 + $0x50] sm:$0xff]
        %v555 = vld [vmem:[#allocation3 + $0x58] sm:$0xff]
        %v556 = vld [vmem:[#allocation3 + $0x60] sm:$0xff]
        %v557 = vld [vmem:[#allocation3 + $0x90] sm:$0xff]
        %v558 = vld [vmem:[#allocation3 + $0x98] sm:$0xff]
        %v559 = vld [vmem:[#allocation3 + $0xa0] sm:$0xff]
        %v560 = vld [vmem:[#allocation3 + $0xa8] sm:$0xff]
        %v561 = vld [vmem:[#allocation3 + $0xd8] sm:$0xff]
        %v562 = vld [vmem:[#allocation3 + $0xe0] sm:$0xff]
        %v563 = vld [vmem:[#allocation3 + $0xe8] sm:$0xff]
        %v564 = vld [vmem:[#allocation3 + $0xf0] sm:$0xff]
        %v565 = vld [vmem:[#allocation3 + $0x120] sm:$0xff]
        %v566 = vld [vmem:[#allocation3 + $0x128] sm:$0xff]
        %v567 = vld [vmem:[#allocation3 + $0x130] sm:$0xff]
        %v568 = vld [vmem:[#allocation3 + $0x138] sm:$0xff]
        %v569 = vld [vmem:[#allocation3 + $0x168] sm:$0xff]
        %v570 = vld [vmem:[#allocation3 + $0x170] sm:$0xff]
        %v571 = vld [vmem:[#allocation3 + $0x178] sm:$0xff]
        %v572 = vld [vmem:[#allocation3 + $0x180] sm:$0xff]
        %v573 = vld [vmem:[#allocation3 + $0x1b0] sm:$0xff]
        %v574 = vld [vmem:[#allocation3 + $0x1b8] sm:$0xff]
        %v575 = vld [vmem:[#allocation3 + $0x1c0] sm:$0xff]
        %v576 = vld [vmem:[#allocation3 + $0x1c8] sm:$0xff]
        %v577 = vld [vmem:[#allocation3 + $0x1f8] sm:$0xff]
        %v578 = vld [vmem:[#allocation3 + $0x200] sm:$0xff]
        %v579 = vld [vmem:[#allocation3 + $0x208] sm:$0xff]
        %v580 = vld [vmem:[#allocation3 + $0x210] sm:$0xff]
        %v581 = vld [vmem:[#allocation4] sm:$0xff]
        %v582 = vld [vmem:[#allocation4 + $0x8] sm:$0xff]
        %v583 = vld [vmem:[#allocation4 + $0x10] sm:$0xff]
        %v584 = vld [vmem:[#allocation4 + $0x18] sm:$0xff]
        %v585 = vld [vmem:[#allocation4 + $0x20] sm:$0xff]
        %v586 = vld [vmem:[#allocation4 + $0x28] sm:$0xff]
        %v587 = vld [vmem:[#allocation4 + $0x30] sm:$0xff]
        %v588 = vld [vmem:[#allocation4 + $0x38] sm:$0xff]
        %v589 = vld [vmem:[#allocation4 + $0x40] sm:$0xff]
        %v590 = vld [vmem:[#allocation4 + $0x48] sm:$0xff]
        %v591 = vld [vmem:[#allocation4 + $0x50] sm:$0xff]
        %v592 = vld [vmem:[#allocation4 + $0x58] sm:$0xff]
        %v593 = vld [vmem:[#allocation4 + $0x60] sm:$0xff]
        %v594 = vld [vmem:[#allocation4 + $0x68] sm:$0xff]
        %v595 = vld [vmem:[#allocation4 + $0x70] sm:$0xff]
        %v596 = vld [vmem:[#allocation4 + $0x78] sm:$0xff]
        %v597 = vld [vmem:[#allocation4 + $0x80] sm:$0xff]
        %v598 = vld [vmem:[#allocation4 + $0x88] sm:$0xff]
        %v599 = vld [vmem:[#allocation4 + $0x90] sm:$0xff]
        %v600 = vld [vmem:[#allocation4 + $0x98] sm:$0xff]
        %v601 = vld [vmem:[#allocation4 + $0xa0] sm:$0xff]
        %v602 = vld [vmem:[#allocation4 + $0xa8] sm:$0xff]
        %v603 = vld [vmem:[#allocation4 + $0xb0] sm:$0xff]
        %v604 = vld [vmem:[#allocation4 + $0xb8] sm:$0xff]
        %v605 = vld [vmem:[#allocation4 + $0xc0] sm:$0xff]
        %v606 = vld [vmem:[#allocation4 + $0xc8] sm:$0xff]
        %v607 = vld [vmem:[#allocation4 + $0xd0] sm:$0xff]
        %v608 = vld [vmem:[#allocation4 + $0xd8] sm:$0xff]
        %v609 = vld [vmem:[#allocation4 + $0xe0] sm:$0xff]
        %v610 = vld [vmem:[#allocation4 + $0xe8] sm:$0xff]
        %v611 = vld [vmem:[#allocation4 + $0xf0] sm:$0xff]
        %v612 = vld [vmem:[#allocation4 + $0xf8] sm:$0xff]
        %v613 = vld [vmem:[#allocation4 + $0x100] sm:$0xff]
        %v614 = vld [vmem:[#allocation4 + $0x108] sm:$0xff]
        %v615 = vld [vmem:[#allocation4 + $0x110] sm:$0xff]
        %v616 = vld [vmem:[#allocation4 + $0x118] sm:$0xff]
        %v617 = vld [vmem:[#allocation4 + $0x120] sm:$0xff]
        %v618 = vld [vmem:[#allocation4 + $0x128] sm:$0xff]
        %v619 = vld [vmem:[#allocation4 + $0x130] sm:$0xff]
        %v620 = vld [vmem:[#allocation4 + $0x138] sm:$0xff]
        %v621 = vld [vmem:[#allocation4 + $0x140] sm:$0xff]
        %v622 = vld [vmem:[#allocation4 + $0x148] sm:$0xff]
        %v623 = vld [vmem:[#allocation4 + $0x150] sm:$0xff]
        %v624 = vld [vmem:[#allocation4 + $0x158] sm:$0xff]
        %v625 = vld [vmem:[#allocation4 + $0x160] sm:$0xff]
        %v626 = vld [vmem:[#allocation4 + $0x168] sm:$0xff]
        %v627 = vld [vmem:[#allocation4 + $0x170] sm:$0xff]
        %v628 = vld [vmem:[#allocation4 + $0x178] sm:$0xff]
        %v629 = vld [vmem:[#allocation4 + $0x180] sm:$0xff]
        %v630 = vld [vmem:[#allocation4 + $0x188] sm:$0xff]
        %v631 = vld [vmem:[#allocation4 + $0x190] sm:$0xff]
        %v632 = vld [vmem:[#allocation4 + $0x198] sm:$0xff]
        %v633 = vld [vmem:[#allocation4 + $0x1a0] sm:$0xff]
        %v634 = vld [vmem:[#allocation4 + $0x1a8] sm:$0xff]
        %v635 = vld [vmem:[#allocation4 + $0x1b0] sm:$0xff]
        %v636 = vld [vmem:[#allocation4 + $0x1b8] sm:$0xff]
        %v637 = vld [vmem:[#allocation4 + $0x1c0] sm:$0xff]
        %v638 = vld [vmem:[#allocation4 + $0x1c8] sm:$0xff]
        %v639 = vld [vmem:[#allocation4 + $0x1d0] sm:$0xff]
        %v640 = vld [vmem:[#allocation4 + $0x1d8] sm:$0xff]
        %v641 = vld [vmem:[#allocation4 + $0x1e0] sm:$0xff]
        %v642 = vld [vmem:[#allocation4 + $0x1e8] sm:$0xff]
        %v643 = vld [vmem:[#allocation4 + $0x1f0] sm:$0xff]
        %v644 = vld [vmem:[#allocation4 + $0x1f8] sm:$0xff]
        %v645 = vld [vmem:[#allocation6] sm:$0x1]
        %v647 = vlaneseq
        %v648 = vshrl.u32 %v647, 7
        %v649 = vsub.s32 0, %v648
        %v650 = vrot.slane %v645, %v649
        %652 = vmatprep.subr.mxu0 0.0
        %653 = vmatpush1.msra.mxu0 %v596
        %654 = vmatprep.subr.mxu0 0.0
        %655 = vmatpush1.msra.mxu0 %v595
        %656 = vmatprep.subr.mxu0 0.0
        %657 = vmatpush1.msra.mxu0 %v594
        %658 = vmatprep.subr.mxu0 0.0
        %659 = vmatpush1.msra.mxu0 %v593
        %660 = vmatprep.subr.mxu0 0.0
        %661 = vmatpush1.msra.mxu0 %v592
        %662 = vmatprep.subr.mxu0 0.0
        %663 = vmatpush1.msra.mxu0 %v591
        %664 = vmatprep.subr.mxu0 0.0
        %665 = vmatpush1.msra.mxu0 %v590
        %666 = vmatprep.subr.mxu0 0.0
        %667 = vmatpush1.msra.mxu0 %v589
        %668 = vmatprep.subr.mxu0 0.0
        %669 = vmatpush1.msra.mxu0 %v588
        %670 = vmatprep.subr.mxu0 0.0
        %671 = vmatpush1.msra.mxu0 %v587
        %672 = vmatprep.subr.mxu0 0.0
        %673 = vmatpush1.msra.mxu0 %v586
        %674 = vmatprep.subr.mxu0 0.0
        %675 = vmatpush1.msra.mxu0 %v585
        %676 = vmatprep.subr.mxu0 0.0
        %677 = vmatpush1.msra.mxu0 %v584
        %678 = vmatprep.subr.mxu0 0.0
        %679 = vmatpush1.msra.mxu0 %v583
        %680 = vmatprep.subr.mxu0 0.0
        %681 = vmatpush1.msra.mxu0 %v582
        %682 = vmatprep.subr.mxu0 0.0
        %683 = vmatpush1.msra.mxu0 %v581
        %684 = vmatprep.subr.mxu0 0.0
        %685 = vmatpush2.msra.mxu0 %v612
        %686 = vmatprep.subr.mxu0 0.0
        %687 = vmatpush2.msra.mxu0 %v611
        %688 = vmatprep.subr.mxu0 0.0
        %689 = vmatpush2.msra.mxu0 %v610
        %690 = vmatprep.subr.mxu0 0.0
        %691 = vmatpush2.msra.mxu0 %v609
        %692 = vmatprep.subr.mxu0 0.0
        %693 = vmatpush2.msra.mxu0 %v608
        %694 = vmatprep.subr.mxu0 0.0
        %695 = vmatpush2.msra.mxu0 %v607
        %696 = vmatprep.subr.mxu0 0.0
        %697 = vmatpush2.msra.mxu0 %v606
        %698 = vmatprep.subr.mxu0 0.0
        %699 = vmatpush2.msra.mxu0 %v605
        %700 = vmatprep.subr.mxu0 0.0
        %701 = vmatpush2.msra.mxu0 %v604
        %702 = vmatprep.subr.mxu0 0.0
        %703 = vmatpush2.msra.mxu0 %v603
        %704 = vmatprep.subr.mxu0 0.0
        %705 = vmatpush2.msra.mxu0 %v602
        %706 = vmatprep.subr.mxu0 0.0
        %707 = vmatpush2.msra.mxu0 %v601
        %708 = vmatprep.subr.mxu0 0.0
        %709 = vmatpush2.msra.mxu0 %v600
        %710 = vmatprep.subr.mxu0 0.0
        %711 = vmatpush2.msra.mxu0 %v599
        %712 = vmatprep.subr.mxu0 0.0
        %713 = vmatpush2.msra.mxu0 %v598
        %714 = vmatprep.subr.mxu0 0.0
        %715 = vmatpush2.msra.mxu0 %v597
        %716 = vmatprep.mubr.f32.mxu0 %v550
        %717 = vmatmul.mubr.f32.gmra.mxu0 %v549
        %v718 = vpop.f32.mrf.mxu0
        %v719 = vadd.f32 %v650, %v718
        %v720 = vpop.f32.mrf.mxu0
        %721 = vmatprep.mubr.f32.mxu0 %v554
        %722 = vmatmul.mubr.f32.gmra.mxu0 %v553
        %v723 = vpop.f32.mrf.mxu0
        %v724 = vadd.f32 %v650, %v723
        %v725 = vpop.f32.mrf.mxu0
        %726 = vmatprep.mubr.f32.mxu0 %v558
        %727 = vmatmul.mubr.f32.gmra.mxu0 %v557
        %v728 = vpop.f32.mrf.mxu0
        %v729 = vadd.f32 %v650, %v728
        %v730 = vpop.f32.mrf.mxu0
        %731 = vmatprep.mubr.f32.mxu0 %v562
        %732 = vmatmul.mubr.f32.gmra.mxu0 %v561
        %v733 = vpop.f32.mrf.mxu0
        %v734 = vadd.f32 %v650, %v733
        %v735 = vpop.f32.mrf.mxu0
        %736 = vmatprep.mubr.f32.mxu0 %v566
        %737 = vmatmul.mubr.f32.gmra.mxu0 %v565
        %v738 = vpop.f32.mrf.mxu0
        %v739 = vadd.f32 %v650, %v738
        %v740 = vpop.f32.mrf.mxu0
        %741 = vmatprep.mubr.f32.mxu0 %v570
        %742 = vmatmul.mubr.f32.gmra.mxu0 %v569
        %v743 = vpop.f32.mrf.mxu0
        %v744 = vadd.f32 %v650, %v743
        %v745 = vpop.f32.mrf.mxu0
        %746 = vmatprep.mubr.f32.mxu0 %v574
        %747 = vmatmul.mubr.f32.gmra.mxu0 %v573
        %v748 = vpop.f32.mrf.mxu0
        %v749 = vadd.f32 %v650, %v748
        %v750 = vpop.f32.mrf.mxu0
        %751 = vmatprep.mubr.f32.mxu0 %v578
        %752 = vmatmul.mubr.f32.gmra.mxu0 %v577
        %v753 = vpop.f32.mrf.mxu0
        %v754 = vadd.f32 %v650, %v753
        %v755 = vpop.f32.mrf.mxu0
        %756 = vdwg.mxu0
        %757 = vmatprep.subr.mxu0 0.0
        %758 = vmatpush1.msra.mxu0 %v628
        %759 = vmatprep.subr.mxu0 0.0
        %760 = vmatpush1.msra.mxu0 %v627
        %761 = vmatprep.subr.mxu0 0.0
        %762 = vmatpush1.msra.mxu0 %v626
        %763 = vmatprep.subr.mxu0 0.0
        %764 = vmatpush1.msra.mxu0 %v625
        %765 = vmatprep.subr.mxu0 0.0
        %766 = vmatpush1.msra.mxu0 %v624
        %767 = vmatprep.subr.mxu0 0.0
        %768 = vmatpush1.msra.mxu0 %v623
        %769 = vmatprep.subr.mxu0 0.0
        %770 = vmatpush1.msra.mxu0 %v622
        %771 = vmatprep.subr.mxu0 0.0
        %772 = vmatpush1.msra.mxu0 %v621
        %773 = vmatprep.subr.mxu0 0.0
        %774 = vmatpush1.msra.mxu0 %v620
        %775 = vmatprep.subr.mxu0 0.0
        %776 = vmatpush1.msra.mxu0 %v619
        %777 = vmatprep.subr.mxu0 0.0
        %778 = vmatpush1.msra.mxu0 %v618
        %779 = vmatprep.subr.mxu0 0.0
        %780 = vmatpush1.msra.mxu0 %v617
        %781 = vmatprep.subr.mxu0 0.0
        %782 = vmatpush1.msra.mxu0 %v616
        %783 = vmatprep.subr.mxu0 0.0
        %784 = vmatpush1.msra.mxu0 %v615
        %785 = vmatprep.subr.mxu0 0.0
        %786 = vmatpush1.msra.mxu0 %v614
        %787 = vmatprep.subr.mxu0 0.0
        %788 = vmatpush1.msra.mxu0 %v613
        %789 = vmatprep.subr.mxu0 0.0
        %790 = vmatpush2.msra.mxu0 %v644
        %791 = vmatprep.subr.mxu0 0.0
        %792 = vmatpush2.msra.mxu0 %v643
        %793 = vmatprep.subr.mxu0 0.0
        %794 = vmatpush2.msra.mxu0 %v642
        %795 = vmatprep.subr.mxu0 0.0
        %796 = vmatpush2.msra.mxu0 %v641
        %797 = vmatprep.subr.mxu0 0.0
        %798 = vmatpush2.msra.mxu0 %v640
        %799 = vmatprep.subr.mxu0 0.0
        %800 = vmatpush2.msra.mxu0 %v639
        %801 = vmatprep.subr.mxu0 0.0
        %802 = vmatpush2.msra.mxu0 %v638
        %803 = vmatprep.subr.mxu0 0.0
        %804 = vmatpush2.msra.mxu0 %v637
        %805 = vmatprep.subr.mxu0 0.0
        %806 = vmatpush2.msra.mxu0 %v636
        %807 = vmatprep.subr.mxu0 0.0
        %808 = vmatpush2.msra.mxu0 %v635
        %809 = vmatprep.subr.mxu0 0.0
        %810 = vmatpush2.msra.mxu0 %v634
        %811 = vmatprep.subr.mxu0 0.0
        %812 = vmatpush2.msra.mxu0 %v633
        %813 = vmatprep.subr.mxu0 0.0
        %814 = vmatpush2.msra.mxu0 %v632
        %815 = vmatprep.subr.mxu0 0.0
        %816 = vmatpush2.msra.mxu0 %v631
        %817 = vmatprep.subr.mxu0 0.0
        %818 = vmatpush2.msra.mxu0 %v630
        %819 = vmatprep.subr.mxu0 0.0
        %820 = vmatpush2.msra.mxu0 %v629
        %821 = vmatprep.mubr.f32.mxu0 %v552
        %822 = vmatmul.mubr.f32.gmra.mxu0 %v551
        %v823 = vpop.f32.mrf.mxu0
        %v824 = vadd.f32 %v719, %v823
        %v825 = vpop.f32.mrf.mxu0
        %826 = vmatprep.mubr.f32.mxu0 %v556
        %827 = vmatmul.mubr.f32.gmra.mxu0 %v555
        %v828 = vpop.f32.mrf.mxu0
        %v829 = vadd.f32 %v724, %v828
        %v830 = vpop.f32.mrf.mxu0
        %831 = vmatprep.mubr.f32.mxu0 %v560
        %832 = vmatmul.mubr.f32.gmra.mxu0 %v559
        %v833 = vpop.f32.mrf.mxu0
        %v834 = vadd.f32 %v729, %v833
        %v835 = vpop.f32.mrf.mxu0
        %836 = vmatprep.mubr.f32.mxu0 %v564
        %837 = vmatmul.mubr.f32.gmra.mxu0 %v563
        %v838 = vpop.f32.mrf.mxu0
        %v839 = vadd.f32 %v734, %v838
        %v840 = vpop.f32.mrf.mxu0
        %841 = vmatprep.mubr.f32.mxu0 %v568
        %842 = vmatmul.mubr.f32.gmra.mxu0 %v567
        %v843 = vpop.f32.mrf.mxu0
        %v844 = vadd.f32 %v739, %v843
        %v845 = vpop.f32.mrf.mxu0
        %846 = vmatprep.mubr.f32.mxu0 %v572
        %847 = vmatmul.mubr.f32.gmra.mxu0 %v571
        %v848 = vpop.f32.mrf.mxu0
        %v849 = vadd.f32 %v744, %v848
        %v850 = vpop.f32.mrf.mxu0
        %851 = vmatprep.mubr.f32.mxu0 %v576
        %852 = vmatmul.mubr.f32.gmra.mxu0 %v575
        %v853 = vpop.f32.mrf.mxu0
        %v854 = vadd.f32 %v749, %v853
        %v855 = vpop.f32.mrf.mxu0
        %856 = vmatprep.mubr.f32.mxu0 %v580
        %857 = vmatmul.mubr.f32.gmra.mxu0 %v579
        %v858 = vpop.f32.mrf.mxu0
        %v859 = vadd.f32 %v754, %v858
        %v860 = vpop.f32.mrf.mxu0
        %861 = vdwg.mxu0
        %v862 = vmax.f32 %v824, 0.0
        %v863 = vmax.f32 %v829, 0.0
        %v864 = vmax.f32 %v834, 0.0
        %v865 = vmax.f32 %v839, 0.0
        %v866 = vmax.f32 %v844, 0.0
        %v867 = vmax.f32 %v849, 0.0
        %v868 = vmax.f32 %v854, 0.0
        %v869 = vmax.f32 %v859, 0.0
        %870 = vst [vmem:[#allocation2] sm:$0xff] 0.0
        %871 = vst [vmem:[#allocation2 + $0x8] sm:$0x3] 0.0
        %872 = vst [vmem:[#allocation2 + $0x10] sm:$0xff] 0.0
        %873 = vst [vmem:[#allocation2 + $0x18] sm:$0x3] 0.0
        %874 = vst [vmem:[#allocation2 + $0x20] sm:$0xff] 0.0
        %875 = vst [vmem:[#allocation2 + $0x28] sm:$0x3] 0.0
        %876 = vst [vmem:[#allocation2 + $0x30] sm:$0xff] 0.0
        %877 = vst [vmem:[#allocation2 + $0x38] sm:$0x3] 0.0
        %878 = vst [vmem:[#allocation2 + $0x40] sm:$0xff] 0.0
        %879 = vst [vmem:[#allocation2 + $0x48] sm:$0x3] 0.0
        %880 = vst [vmem:[#allocation2 + $0x50] sm:$0xff] 0.0
        %881 = vst [vmem:[#allocation2 + $0x58] sm:$0x3] 0.0
        %882 = vst [vmem:[#allocation2 + $0x60] sm:$0xff] 0.0
        %883 = vst [vmem:[#allocation2 + $0x68] sm:$0x3] 0.0
        %884 = vst [vmem:[#allocation2 + $0x70] sm:$0xff] 0.0
        %885 = vst [vmem:[#allocation2 + $0x78] sm:$0x3] 0.0
        %886 = vst [vmem:[#allocation2 + $0x80] sm:$0xff] 0.0
        %887 = vst [vmem:[#allocation2 + $0x88] sm:$0x3] 0.0
        %888 = vst [vmem:[#allocation2 + $0x90] sm:$0xff] 0.0
        %889 = vst [vmem:[#allocation2 + $0x98] sm:$0x3] 0.0
        loop: start=0, step=1, limit=13
        $region89: #{mobilenet_pallas.1} parent=55 // loop_pre_header
          _
        $region90: #{mobilenet_pallas.1} parent=55 // loop_header
          %s891 = sphi 0, %s895
          %p892 = scmp.ge.s32.totalorder %s891, 13
          %v896 = vphi %v862, %v1996
          %v897 = vphi %v863, %v1997
          %v898 = vphi %v864, %v1998
          %v899 = vphi %v865, %v1999
          %v900 = vphi %v866, %v2000
          %v901 = vphi %v867, %v2001
          %v902 = vphi %v868, %v2002
          %v903 = vphi %v869, %v2003
        $region91: #{mobilenet_pallas.1} parent=55 // loop_header_branch
          %894 = sbr.rel (%p892) target = $region95
        $region92: #{mobilenet_pallas.1} parent=55 // loop_body
          %s904 = scalar_lea.vmem [#allocation2], 16
          %905 = vst [vmem:[%s904 + $0x1] sm:$0xff] %v896
          %906 = vst [vmem:[%s904 + $0x11] sm:$0xff] %v897
          %907 = vst [vmem:[%s904 + $0x21] sm:$0xff] %v898
          %908 = vst [vmem:[%s904 + $0x31] sm:$0xff] %v899
          %909 = vst [vmem:[%s904 + $0x41] sm:$0xff] %v900
          %910 = vst [vmem:[%s904 + $0x51] sm:$0xff] %v901
          %911 = vst [vmem:[%s904 + $0x61] sm:$0xff] %v902
          %912 = vst [vmem:[%s904 + $0x71] sm:$0xff] %v903
          %v913 = vld [vmem:[#allocation2] sm:$0xff]
          %v914 = vld [vmem:[#allocation2 + $0x8] sm:$0x3]
          %v915 = vld [vmem:[#allocation2 + $0x10] sm:$0xff]
          %v916 = vld [vmem:[#allocation2 + $0x18] sm:$0x3]
          %v917 = vld [vmem:[#allocation2 + $0x20] sm:$0xff]
          %v918 = vld [vmem:[#allocation2 + $0x28] sm:$0x3]
          %v919 = vld [vmem:[#allocation2 + $0x30] sm:$0xff]
          %v920 = vld [vmem:[#allocation2 + $0x38] sm:$0x3]
          %v921 = vld [vmem:[#allocation2 + $0x40] sm:$0xff]
          %v922 = vld [vmem:[#allocation2 + $0x48] sm:$0x3]
          %v923 = vld [vmem:[#allocation2 + $0x50] sm:$0xff]
          %v924 = vld [vmem:[#allocation2 + $0x58] sm:$0x3]
          %v925 = vld [vmem:[#allocation2 + $0x60] sm:$0xff]
          %v926 = vld [vmem:[#allocation2 + $0x68] sm:$0x3]
          %v927 = vld [vmem:[#allocation2 + $0x70] sm:$0xff]
          %v928 = vld [vmem:[#allocation2 + $0x78] sm:$0x3]
          %v929 = vld [vmem:[#allocation2 + $0x80] sm:$0xff]
          %v930 = vld [vmem:[#allocation2 + $0x88] sm:$0x3]
          %v931 = vld [vmem:[#allocation2 + $0x90] sm:$0xff]
          %v932 = vld [vmem:[#allocation2 + $0x98] sm:$0x3]
          %933 = vst [vmem:[#allocation3] sm:$0xff] %v913
          %934 = vst [vmem:[#allocation3 + $0x48] sm:$0xff] %v915
          %935 = vst [vmem:[#allocation3 + $0x90] sm:$0xff] %v917
          %936 = vst [vmem:[#allocation3 + $0xd8] sm:$0xff] %v919
          %937 = vst [vmem:[#allocation3 + $0x120] sm:$0xff] %v921
          %938 = vst [vmem:[#allocation3 + $0x168] sm:$0xff] %v923
          %939 = vst [vmem:[#allocation3 + $0x1b0] sm:$0xff] %v925
          %940 = vst [vmem:[#allocation3 + $0x1f8] sm:$0xff] %v927
          %v957 = vrot.slane %v913, 1
          %v958 = vrot.slane %v914, 1
          %v959 = vsel %vm486, %v957, %v958
          %v960 = vrot.slane %v915, 1
          %v961 = vrot.slane %v916, 1
          %v962 = vsel %vm486, %v960, %v961
          %v963 = vrot.slane %v917, 1
          %v964 = vrot.slane %v918, 1
          %v965 = vsel %vm486, %v963, %v964
          %v966 = vrot.slane %v919, 1
          %v967 = vrot.slane %v920, 1
          %v968 = vsel %vm486, %v966, %v967
          %v969 = vrot.slane %v921, 1
          %v970 = vrot.slane %v922, 1
          %v971 = vsel %vm486, %v969, %v970
          %v972 = vrot.slane %v923, 1
          %v973 = vrot.slane %v924, 1
          %v974 = vsel %vm486, %v972, %v973
          %v975 = vrot.slane %v925, 1
          %v976 = vrot.slane %v926, 1
          %v977 = vsel %vm486, %v975, %v976
          %v978 = vrot.slane %v927, 1
          %v979 = vrot.slane %v928, 1
          %v980 = vsel %vm486, %v978, %v979
          %989 = vst [vmem:[#allocation3 + $0x8] sm:$0xff] %v959
          %990 = vst [vmem:[#allocation3 + $0x50] sm:$0xff] %v962
          %991 = vst [vmem:[#allocation3 + $0x98] sm:$0xff] %v965
          %992 = vst [vmem:[#allocation3 + $0xe0] sm:$0xff] %v968
          %993 = vst [vmem:[#allocation3 + $0x128] sm:$0xff] %v971
          %994 = vst [vmem:[#allocation3 + $0x170] sm:$0xff] %v974
          %995 = vst [vmem:[#allocation3 + $0x1b8] sm:$0xff] %v977
          %996 = vst [vmem:[#allocation3 + $0x200] sm:$0xff] %v980
          %vm997 = vcmask 1045504
          %v998 = vrot.slane %v913, 2
          %v999 = vrot.slane %v914, 2
          %v1000 = vsel %vm997, %v998, %v999
          %v1001 = vrot.slane %v915, 2
          %v1002 = vrot.slane %v916, 2
          %v1003 = vsel %vm997, %v1001, %v1002
          %v1004 = vrot.slane %v917, 2
          %v1005 = vrot.slane %v918, 2
          %v1006 = vsel %vm997, %v1004, %v1005
          %v1007 = vrot.slane %v919, 2
          %v1008 = vrot.slane %v920, 2
          %v1009 = vsel %vm997, %v1007, %v1008
          %v1010 = vrot.slane %v921, 2
          %v1011 = vrot.slane %v922, 2
          %v1012 = vsel %vm997, %v1010, %v1011
          %v1013 = vrot.slane %v923, 2
          %v1014 = vrot.slane %v924, 2
          %v1015 = vsel %vm997, %v1013, %v1014
          %v1016 = vrot.slane %v925, 2
          %v1017 = vrot.slane %v926, 2
          %v1018 = vsel %vm997, %v1016, %v1017
          %v1019 = vrot.slane %v927, 2
          %v1020 = vrot.slane %v928, 2
          %v1021 = vsel %vm997, %v1019, %v1020
          %1030 = vst [vmem:[#allocation3 + $0x10] sm:$0xff] %v1000
          %1031 = vst [vmem:[#allocation3 + $0x58] sm:$0xff] %v1003
          %1032 = vst [vmem:[#allocation3 + $0xa0] sm:$0xff] %v1006
          %1033 = vst [vmem:[#allocation3 + $0xe8] sm:$0xff] %v1009
          %1034 = vst [vmem:[#allocation3 + $0x130] sm:$0xff] %v1012
          %1035 = vst [vmem:[#allocation3 + $0x178] sm:$0xff] %v1015
          %1036 = vst [vmem:[#allocation3 + $0x1c0] sm:$0xff] %v1018
          %1037 = vst [vmem:[#allocation3 + $0x208] sm:$0xff] %v1021
          %1038 = vst [vmem:[#allocation3 + $0x18] sm:$0xff] %v915
          %1039 = vst [vmem:[#allocation3 + $0x60] sm:$0xff] %v917
          %1040 = vst [vmem:[#allocation3 + $0xa8] sm:$0xff] %v919
          %1041 = vst [vmem:[#allocation3 + $0xf0] sm:$0xff] %v921
          %1042 = vst [vmem:[#allocation3 + $0x138] sm:$0xff] %v923
          %1043 = vst [vmem:[#allocation3 + $0x180] sm:$0xff] %v925
          %1044 = vst [vmem:[#allocation3 + $0x1c8] sm:$0xff] %v927
          %1045 = vst [vmem:[#allocation3 + $0x210] sm:$0xff] %v929
          %v1048 = vrot.slane %v929, 1
          %v1049 = vrot.slane %v930, 1
          %v1050 = vsel %vm486, %v1048, %v1049
          %1052 = vst [vmem:[#allocation3 + $0x20] sm:$0xff] %v962
          %1053 = vst [vmem:[#allocation3 + $0x68] sm:$0xff] %v965
          %1054 = vst [vmem:[#allocation3 + $0xb0] sm:$0xff] %v968
          %1055 = vst [vmem:[#allocation3 + $0xf8] sm:$0xff] %v971
          %1056 = vst [vmem:[#allocation3 + $0x140] sm:$0xff] %v974
          %1057 = vst [vmem:[#allocation3 + $0x188] sm:$0xff] %v977
          %1058 = vst [vmem:[#allocation3 + $0x1d0] sm:$0xff] %v980
          %1059 = vst [vmem:[#allocation3 + $0x218] sm:$0xff] %v1050
          %v1060 = vrot.slane %v929, 2
          %v1061 = vrot.slane %v930, 2
          %v1062 = vsel %vm997, %v1060, %v1061
          %1064 = vst [vmem:[#allocation3 + $0x28] sm:$0xff] %v1003
          %1065 = vst [vmem:[#allocation3 + $0x70] sm:$0xff] %v1006
          %1066 = vst [vmem:[#allocation3 + $0xb8] sm:$0xff] %v1009
          %1067 = vst [vmem:[#allocation3 + $0x100] sm:$0xff] %v1012
          %1068 = vst [vmem:[#allocation3 + $0x148] sm:$0xff] %v1015
          %1069 = vst [vmem:[#allocation3 + $0x190] sm:$0xff] %v1018
          %1070 = vst [vmem:[#allocation3 + $0x1d8] sm:$0xff] %v1021
          %1071 = vst [vmem:[#allocation3 + $0x220] sm:$0xff] %v1062
          %1072 = vst [vmem:[#allocation3 + $0x30] sm:$0xff] %v917
          %1073 = vst [vmem:[#allocation3 + $0x78] sm:$0xff] %v919
          %1074 = vst [vmem:[#allocation3 + $0xc0] sm:$0xff] %v921
          %1075 = vst [vmem:[#allocation3 + $0x108] sm:$0xff] %v923
          %1076 = vst [vmem:[#allocation3 + $0x150] sm:$0xff] %v925
          %1077 = vst [vmem:[#allocation3 + $0x198] sm:$0xff] %v927
          %1078 = vst [vmem:[#allocation3 + $0x1e0] sm:$0xff] %v929
          %1079 = vst [vmem:[#allocation3 + $0x228] sm:$0xff] %v931
          %v1082 = vrot.slane %v931, 1
          %v1083 = vrot.slane %v932, 1
          %v1084 = vsel %vm486, %v1082, %v1083
          %1086 = vst [vmem:[#allocation3 + $0x38] sm:$0xff] %v965
          %1087 = vst [vmem:[#allocation3 + $0x80] sm:$0xff] %v968
          %1088 = vst [vmem:[#allocation3 + $0xc8] sm:$0xff] %v971
          %1089 = vst [vmem:[#allocation3 + $0x110] sm:$0xff] %v974
          %1090 = vst [vmem:[#allocation3 + $0x158] sm:$0xff] %v977
          %1091 = vst [vmem:[#allocation3 + $0x1a0] sm:$0xff] %v980
          %1092 = vst [vmem:[#allocation3 + $0x1e8] sm:$0xff] %v1050
          %1093 = vst [vmem:[#allocation3 + $0x230] sm:$0xff] %v1084
          %v1094 = vrot.slane %v931, 2
          %v1095 = vrot.slane %v932, 2
          %v1096 = vsel %vm997, %v1094, %v1095
          %1098 = vst [vmem:[#allocation3 + $0x40] sm:$0xff] %v1006
          %1099 = vst [vmem:[#allocation3 + $0x88] sm:$0xff] %v1009
          %1100 = vst [vmem:[#allocation3 + $0xd0] sm:$0xff] %v1012
          %1101 = vst [vmem:[#allocation3 + $0x118] sm:$0xff] %v1015
          %1102 = vst [vmem:[#allocation3 + $0x160] sm:$0xff] %v1018
          %1103 = vst [vmem:[#allocation3 + $0x1a8] sm:$0xff] %v1021
          %1104 = vst [vmem:[#allocation3 + $0x1f0] sm:$0xff] %v1062
          %1105 = vst [vmem:[#allocation3 + $0x238] sm:$0xff] %v1096
          %v1106 = vld [vmem:[#allocation3] sm:$0xff]
          %v1107 = vld [vmem:[#allocation3 + $0x8] sm:$0xff]
          %v1108 = vld [vmem:[#allocation3 + $0x10] sm:$0xff]
          %v1109 = vld [vmem:[#allocation3 + $0x18] sm:$0xff]
          %v1110 = vld [vmem:[#allocation3 + $0x20] sm:$0xff]
          %v1111 = vld [vmem:[#allocation3 + $0x28] sm:$0xff]
          %v1112 = vld [vmem:[#allocation3 + $0x30] sm:$0xff]
          %v1113 = vld [vmem:[#allocation3 + $0x38] sm:$0xff]
          %v1114 = vld [vmem:[#allocation3 + $0x40] sm:$0xff]
          %v1115 = vld [vmem:[#allocation3 + $0x48] sm:$0xff]
          %v1116 = vld [vmem:[#allocation3 + $0x50] sm:$0xff]
          %v1117 = vld [vmem:[#allocation3 + $0x58] sm:$0xff]
          %v1118 = vld [vmem:[#allocation3 + $0x60] sm:$0xff]
          %v1119 = vld [vmem:[#allocation3 + $0x68] sm:$0xff]
          %v1120 = vld [vmem:[#allocation3 + $0x70] sm:$0xff]
          %v1121 = vld [vmem:[#allocation3 + $0x78] sm:$0xff]
          %v1122 = vld [vmem:[#allocation3 + $0x80] sm:$0xff]
          %v1123 = vld [vmem:[#allocation3 + $0x88] sm:$0xff]
          %v1124 = vld [vmem:[#allocation3 + $0x90] sm:$0xff]
          %v1125 = vld [vmem:[#allocation3 + $0x98] sm:$0xff]
          %v1126 = vld [vmem:[#allocation3 + $0xa0] sm:$0xff]
          %v1127 = vld [vmem:[#allocation3 + $0xa8] sm:$0xff]
          %v1128 = vld [vmem:[#allocation3 + $0xb0] sm:$0xff]
          %v1129 = vld [vmem:[#allocation3 + $0xb8] sm:$0xff]
          %v1130 = vld [vmem:[#allocation3 + $0xc0] sm:$0xff]
          %v1131 = vld [vmem:[#allocation3 + $0xc8] sm:$0xff]
          %v1132 = vld [vmem:[#allocation3 + $0xd0] sm:$0xff]
          %v1133 = vld [vmem:[#allocation3 + $0xd8] sm:$0xff]
          %v1134 = vld [vmem:[#allocation3 + $0xe0] sm:$0xff]
          %v1135 = vld [vmem:[#allocation3 + $0xe8] sm:$0xff]
          %v1136 = vld [vmem:[#allocation3 + $0xf0] sm:$0xff]
          %v1137 = vld [vmem:[#allocation3 + $0xf8] sm:$0xff]
          %v1138 = vld [vmem:[#allocation3 + $0x100] sm:$0xff]
          %v1139 = vld [vmem:[#allocation3 + $0x108] sm:$0xff]
          %v1140 = vld [vmem:[#allocation3 + $0x110] sm:$0xff]
          %v1141 = vld [vmem:[#allocation3 + $0x118] sm:$0xff]
          %v1142 = vld [vmem:[#allocation3 + $0x120] sm:$0xff]
          %v1143 = vld [vmem:[#allocation3 + $0x128] sm:$0xff]
          %v1144 = vld [vmem:[#allocation3 + $0x130] sm:$0xff]
          %v1145 = vld [vmem:[#allocation3 + $0x138] sm:$0xff]
          %v1146 = vld [vmem:[#allocation3 + $0x140] sm:$0xff]
          %v1147 = vld [vmem:[#allocation3 + $0x148] sm:$0xff]
          %v1148 = vld [vmem:[#allocation3 + $0x150] sm:$0xff]
          %v1149 = vld [vmem:[#allocation3 + $0x158] sm:$0xff]
          %v1150 = vld [vmem:[#allocation3 + $0x160] sm:$0xff]
          %v1151 = vld [vmem:[#allocation3 + $0x168] sm:$0xff]
          %v1152 = vld [vmem:[#allocation3 + $0x170] sm:$0xff]
          %v1153 = vld [vmem:[#allocation3 + $0x178] sm:$0xff]
          %v1154 = vld [vmem:[#allocation3 + $0x180] sm:$0xff]
          %v1155 = vld [vmem:[#allocation3 + $0x188] sm:$0xff]
          %v1156 = vld [vmem:[#allocation3 + $0x190] sm:$0xff]
          %v1157 = vld [vmem:[#allocation3 + $0x198] sm:$0xff]
          %v1158 = vld [vmem:[#allocation3 + $0x1a0] sm:$0xff]
          %v1159 = vld [vmem:[#allocation3 + $0x1a8] sm:$0xff]
          %v1160 = vld [vmem:[#allocation3 + $0x1b0] sm:$0xff]
          %v1161 = vld [vmem:[#allocation3 + $0x1b8] sm:$0xff]
          %v1162 = vld [vmem:[#allocation3 + $0x1c0] sm:$0xff]
          %v1163 = vld [vmem:[#allocation3 + $0x1c8] sm:$0xff]
          %v1164 = vld [vmem:[#allocation3 + $0x1d0] sm:$0xff]
          %v1165 = vld [vmem:[#allocation3 + $0x1d8] sm:$0xff]
          %v1166 = vld [vmem:[#allocation3 + $0x1e0] sm:$0xff]
          %v1167 = vld [vmem:[#allocation3 + $0x1e8] sm:$0xff]
          %v1168 = vld [vmem:[#allocation3 + $0x1f0] sm:$0xff]
          %v1169 = vld [vmem:[#allocation3 + $0x1f8] sm:$0xff]
          %v1170 = vld [vmem:[#allocation3 + $0x200] sm:$0xff]
          %v1171 = vld [vmem:[#allocation3 + $0x208] sm:$0xff]
          %v1172 = vld [vmem:[#allocation3 + $0x210] sm:$0xff]
          %v1173 = vld [vmem:[#allocation3 + $0x218] sm:$0xff]
          %v1174 = vld [vmem:[#allocation3 + $0x220] sm:$0xff]
          %v1175 = vld [vmem:[#allocation3 + $0x228] sm:$0xff]
          %v1176 = vld [vmem:[#allocation3 + $0x230] sm:$0xff]
          %v1177 = vld [vmem:[#allocation3 + $0x238] sm:$0xff]
          %s1178 = smul.u32 %s891, 1152
          %s1179 = scalar_lea.vmem [#allocation8], %s1178
          %v1180 = vld [vmem:[%s1179] sm:$0xff]
          %v1181 = vld [vmem:[%s1179 + $0x8] sm:$0xff]
          %v1182 = vld [vmem:[%s1179 + $0x10] sm:$0xff]
          %v1183 = vld [vmem:[%s1179 + $0x18] sm:$0xff]
          %v1184 = vld [vmem:[%s1179 + $0x20] sm:$0xff]
          %v1185 = vld [vmem:[%s1179 + $0x28] sm:$0xff]
          %v1186 = vld [vmem:[%s1179 + $0x30] sm:$0xff]
          %v1187 = vld [vmem:[%s1179 + $0x38] sm:$0xff]
          %v1188 = vld [vmem:[%s1179 + $0x40] sm:$0xff]
          %v1189 = vld [vmem:[%s1179 + $0x48] sm:$0xff]
          %v1190 = vld [vmem:[%s1179 + $0x50] sm:$0xff]
          %v1191 = vld [vmem:[%s1179 + $0x58] sm:$0xff]
          %v1192 = vld [vmem:[%s1179 + $0x60] sm:$0xff]
          %v1193 = vld [vmem:[%s1179 + $0x68] sm:$0xff]
          %v1194 = vld [vmem:[%s1179 + $0x70] sm:$0xff]
          %v1195 = vld [vmem:[%s1179 + $0x78] sm:$0xff]
          %v1196 = vld [vmem:[%s1179 + $0x80] sm:$0xff]
          %v1197 = vld [vmem:[%s1179 + $0x88] sm:$0xff]
          %v1198 = vld [vmem:[%s1179 + $0x90] sm:$0xff]
          %v1199 = vld [vmem:[%s1179 + $0x98] sm:$0xff]
          %v1200 = vld [vmem:[%s1179 + $0xa0] sm:$0xff]
          %v1201 = vld [vmem:[%s1179 + $0xa8] sm:$0xff]
          %v1202 = vld [vmem:[%s1179 + $0xb0] sm:$0xff]
          %v1203 = vld [vmem:[%s1179 + $0xb8] sm:$0xff]
          %v1204 = vld [vmem:[%s1179 + $0xc0] sm:$0xff]
          %v1205 = vld [vmem:[%s1179 + $0xc8] sm:$0xff]
          %v1206 = vld [vmem:[%s1179 + $0xd0] sm:$0xff]
          %v1207 = vld [vmem:[%s1179 + $0xd8] sm:$0xff]
          %v1208 = vld [vmem:[%s1179 + $0xe0] sm:$0xff]
          %v1209 = vld [vmem:[%s1179 + $0xe8] sm:$0xff]
          %v1210 = vld [vmem:[%s1179 + $0xf0] sm:$0xff]
          %v1211 = vld [vmem:[%s1179 + $0xf8] sm:$0xff]
          %v1212 = vld [vmem:[%s1179 + $0x100] sm:$0xff]
          %v1213 = vld [vmem:[%s1179 + $0x108] sm:$0xff]
          %v1214 = vld [vmem:[%s1179 + $0x110] sm:$0xff]
          %v1215 = vld [vmem:[%s1179 + $0x118] sm:$0xff]
          %v1216 = vld [vmem:[%s1179 + $0x120] sm:$0xff]
          %v1217 = vld [vmem:[%s1179 + $0x128] sm:$0xff]
          %v1218 = vld [vmem:[%s1179 + $0x130] sm:$0xff]
          %v1219 = vld [vmem:[%s1179 + $0x138] sm:$0xff]
          %v1220 = vld [vmem:[%s1179 + $0x140] sm:$0xff]
          %v1221 = vld [vmem:[%s1179 + $0x148] sm:$0xff]
          %v1222 = vld [vmem:[%s1179 + $0x150] sm:$0xff]
          %v1223 = vld [vmem:[%s1179 + $0x158] sm:$0xff]
          %v1224 = vld [vmem:[%s1179 + $0x160] sm:$0xff]
          %v1225 = vld [vmem:[%s1179 + $0x168] sm:$0xff]
          %v1226 = vld [vmem:[%s1179 + $0x170] sm:$0xff]
          %v1227 = vld [vmem:[%s1179 + $0x178] sm:$0xff]
          %v1228 = vld [vmem:[%s1179 + $0x180] sm:$0xff]
          %v1229 = vld [vmem:[%s1179 + $0x188] sm:$0xff]
          %v1230 = vld [vmem:[%s1179 + $0x190] sm:$0xff]
          %v1231 = vld [vmem:[%s1179 + $0x198] sm:$0xff]
          %v1232 = vld [vmem:[%s1179 + $0x1a0] sm:$0xff]
          %v1233 = vld [vmem:[%s1179 + $0x1a8] sm:$0xff]
          %v1234 = vld [vmem:[%s1179 + $0x1b0] sm:$0xff]
          %v1235 = vld [vmem:[%s1179 + $0x1b8] sm:$0xff]
          %v1236 = vld [vmem:[%s1179 + $0x1c0] sm:$0xff]
          %v1237 = vld [vmem:[%s1179 + $0x1c8] sm:$0xff]
          %v1238 = vld [vmem:[%s1179 + $0x1d0] sm:$0xff]
          %v1239 = vld [vmem:[%s1179 + $0x1d8] sm:$0xff]
          %v1240 = vld [vmem:[%s1179 + $0x1e0] sm:$0xff]
          %v1241 = vld [vmem:[%s1179 + $0x1e8] sm:$0xff]
          %v1242 = vld [vmem:[%s1179 + $0x1f0] sm:$0xff]
          %v1243 = vld [vmem:[%s1179 + $0x1f8] sm:$0xff]
          %v1244 = vld [vmem:[%s1179 + $0x200] sm:$0xff]
          %v1245 = vld [vmem:[%s1179 + $0x208] sm:$0xff]
          %v1246 = vld [vmem:[%s1179 + $0x210] sm:$0xff]
          %v1247 = vld [vmem:[%s1179 + $0x218] sm:$0xff]
          %v1248 = vld [vmem:[%s1179 + $0x220] sm:$0xff]
          %v1249 = vld [vmem:[%s1179 + $0x228] sm:$0xff]
          %v1250 = vld [vmem:[%s1179 + $0x230] sm:$0xff]
          %v1251 = vld [vmem:[%s1179 + $0x238] sm:$0xff]
          %v1252 = vld [vmem:[%s1179 + $0x240] sm:$0xff]
          %v1253 = vld [vmem:[%s1179 + $0x248] sm:$0xff]
          %v1254 = vld [vmem:[%s1179 + $0x250] sm:$0xff]
          %v1255 = vld [vmem:[%s1179 + $0x258] sm:$0xff]
          %v1256 = vld [vmem:[%s1179 + $0x260] sm:$0xff]
          %v1257 = vld [vmem:[%s1179 + $0x268] sm:$0xff]
          %v1258 = vld [vmem:[%s1179 + $0x270] sm:$0xff]
          %v1259 = vld [vmem:[%s1179 + $0x278] sm:$0xff]
          %v1260 = vld [vmem:[%s1179 + $0x280] sm:$0xff]
          %v1261 = vld [vmem:[%s1179 + $0x288] sm:$0xff]
          %v1262 = vld [vmem:[%s1179 + $0x290] sm:$0xff]
          %v1263 = vld [vmem:[%s1179 + $0x298] sm:$0xff]
          %v1264 = vld [vmem:[%s1179 + $0x2a0] sm:$0xff]
          %v1265 = vld [vmem:[%s1179 + $0x2a8] sm:$0xff]
          %v1266 = vld [vmem:[%s1179 + $0x2b0] sm:$0xff]
          %v1267 = vld [vmem:[%s1179 + $0x2b8] sm:$0xff]
          %v1268 = vld [vmem:[%s1179 + $0x2c0] sm:$0xff]
          %v1269 = vld [vmem:[%s1179 + $0x2c8] sm:$0xff]
          %v1270 = vld [vmem:[%s1179 + $0x2d0] sm:$0xff]
          %v1271 = vld [vmem:[%s1179 + $0x2d8] sm:$0xff]
          %v1272 = vld [vmem:[%s1179 + $0x2e0] sm:$0xff]
          %v1273 = vld [vmem:[%s1179 + $0x2e8] sm:$0xff]
          %v1274 = vld [vmem:[%s1179 + $0x2f0] sm:$0xff]
          %v1275 = vld [vmem:[%s1179 + $0x2f8] sm:$0xff]
          %v1276 = vld [vmem:[%s1179 + $0x300] sm:$0xff]
          %v1277 = vld [vmem:[%s1179 + $0x308] sm:$0xff]
          %v1278 = vld [vmem:[%s1179 + $0x310] sm:$0xff]
          %v1279 = vld [vmem:[%s1179 + $0x318] sm:$0xff]
          %v1280 = vld [vmem:[%s1179 + $0x320] sm:$0xff]
          %v1281 = vld [vmem:[%s1179 + $0x328] sm:$0xff]
          %v1282 = vld [vmem:[%s1179 + $0x330] sm:$0xff]
          %v1283 = vld [vmem:[%s1179 + $0x338] sm:$0xff]
          %v1284 = vld [vmem:[%s1179 + $0x340] sm:$0xff]
          %v1285 = vld [vmem:[%s1179 + $0x348] sm:$0xff]
          %v1286 = vld [vmem:[%s1179 + $0x350] sm:$0xff]
          %v1287 = vld [vmem:[%s1179 + $0x358] sm:$0xff]
          %v1288 = vld [vmem:[%s1179 + $0x360] sm:$0xff]
          %v1289 = vld [vmem:[%s1179 + $0x368] sm:$0xff]
          %v1290 = vld [vmem:[%s1179 + $0x370] sm:$0xff]
          %v1291 = vld [vmem:[%s1179 + $0x378] sm:$0xff]
          %v1292 = vld [vmem:[%s1179 + $0x380] sm:$0xff]
          %v1293 = vld [vmem:[%s1179 + $0x388] sm:$0xff]
          %v1294 = vld [vmem:[%s1179 + $0x390] sm:$0xff]
          %v1295 = vld [vmem:[%s1179 + $0x398] sm:$0xff]
          %v1296 = vld [vmem:[%s1179 + $0x3a0] sm:$0xff]
          %v1297 = vld [vmem:[%s1179 + $0x3a8] sm:$0xff]
          %v1298 = vld [vmem:[%s1179 + $0x3b0] sm:$0xff]
          %v1299 = vld [vmem:[%s1179 + $0x3b8] sm:$0xff]
          %v1300 = vld [vmem:[%s1179 + $0x3c0] sm:$0xff]
          %v1301 = vld [vmem:[%s1179 + $0x3c8] sm:$0xff]
          %v1302 = vld [vmem:[%s1179 + $0x3d0] sm:$0xff]
          %v1303 = vld [vmem:[%s1179 + $0x3d8] sm:$0xff]
          %v1304 = vld [vmem:[%s1179 + $0x3e0] sm:$0xff]
          %v1305 = vld [vmem:[%s1179 + $0x3e8] sm:$0xff]
          %v1306 = vld [vmem:[%s1179 + $0x3f0] sm:$0xff]
          %v1307 = vld [vmem:[%s1179 + $0x3f8] sm:$0xff]
          %v1308 = vld [vmem:[%s1179 + $0x400] sm:$0xff]
          %v1309 = vld [vmem:[%s1179 + $0x408] sm:$0xff]
          %v1310 = vld [vmem:[%s1179 + $0x410] sm:$0xff]
          %v1311 = vld [vmem:[%s1179 + $0x418] sm:$0xff]
          %v1312 = vld [vmem:[%s1179 + $0x420] sm:$0xff]
          %v1313 = vld [vmem:[%s1179 + $0x428] sm:$0xff]
          %v1314 = vld [vmem:[%s1179 + $0x430] sm:$0xff]
          %v1315 = vld [vmem:[%s1179 + $0x438] sm:$0xff]
          %v1316 = vld [vmem:[%s1179 + $0x440] sm:$0xff]
          %v1317 = vld [vmem:[%s1179 + $0x448] sm:$0xff]
          %v1318 = vld [vmem:[%s1179 + $0x450] sm:$0xff]
          %v1319 = vld [vmem:[%s1179 + $0x458] sm:$0xff]
          %v1320 = vld [vmem:[%s1179 + $0x460] sm:$0xff]
          %v1321 = vld [vmem:[%s1179 + $0x468] sm:$0xff]
          %v1322 = vld [vmem:[%s1179 + $0x470] sm:$0xff]
          %v1323 = vld [vmem:[%s1179 + $0x478] sm:$0xff]
          %s1324 = scalar_lea.vmem [#allocation9], %s891
          %v1325 = vld [vmem:[%s1324] sm:$0x1]
          %v1327 = vlaneseq
          %v1328 = vshrl.u32 %v1327, 7
          %v1329 = vsub.s32 0, %v1328
          %v1330 = vrot.slane %v1325, %v1329
          %1332 = vmatprep.subr.mxu0 0.0
          %1333 = vmatpush1.msra.mxu0 %v1195
          %1334 = vmatprep.subr.mxu0 0.0
          %1335 = vmatpush1.msra.mxu0 %v1194
          %1336 = vmatprep.subr.mxu0 0.0
          %1337 = vmatpush1.msra.mxu0 %v1193
          %1338 = vmatprep.subr.mxu0 0.0
          %1339 = vmatpush1.msra.mxu0 %v1192
          %1340 = vmatprep.subr.mxu0 0.0
          %1341 = vmatpush1.msra.mxu0 %v1191
          %1342 = vmatprep.subr.mxu0 0.0
          %1343 = vmatpush1.msra.mxu0 %v1190
          %1344 = vmatprep.subr.mxu0 0.0
          %1345 = vmatpush1.msra.mxu0 %v1189
          %1346 = vmatprep.subr.mxu0 0.0
          %1347 = vmatpush1.msra.mxu0 %v1188
          %1348 = vmatprep.subr.mxu0 0.0
          %1349 = vmatpush1.msra.mxu0 %v1187
          %1350 = vmatprep.subr.mxu0 0.0
          %1351 = vmatpush1.msra.mxu0 %v1186
          %1352 = vmatprep.subr.mxu0 0.0
          %1353 = vmatpush1.msra.mxu0 %v1185
          %1354 = vmatprep.subr.mxu0 0.0
          %1355 = vmatpush1.msra.mxu0 %v1184
          %1356 = vmatprep.subr.mxu0 0.0
          %1357 = vmatpush1.msra.mxu0 %v1183
          %1358 = vmatprep.subr.mxu0 0.0
          %1359 = vmatpush1.msra.mxu0 %v1182
          %1360 = vmatprep.subr.mxu0 0.0
          %1361 = vmatpush1.msra.mxu0 %v1181
          %1362 = vmatprep.subr.mxu0 0.0
          %1363 = vmatpush1.msra.mxu0 %v1180
          %1364 = vmatprep.subr.mxu0 0.0
          %1365 = vmatpush2.msra.mxu0 %v1211
          %1366 = vmatprep.subr.mxu0 0.0
          %1367 = vmatpush2.msra.mxu0 %v1210
          %1368 = vmatprep.subr.mxu0 0.0
          %1369 = vmatpush2.msra.mxu0 %v1209
          %1370 = vmatprep.subr.mxu0 0.0
          %1371 = vmatpush2.msra.mxu0 %v1208
          %1372 = vmatprep.subr.mxu0 0.0
          %1373 = vmatpush2.msra.mxu0 %v1207
          %1374 = vmatprep.subr.mxu0 0.0
          %1375 = vmatpush2.msra.mxu0 %v1206
          %1376 = vmatprep.subr.mxu0 0.0
          %1377 = vmatpush2.msra.mxu0 %v1205
          %1378 = vmatprep.subr.mxu0 0.0
          %1379 = vmatpush2.msra.mxu0 %v1204
          %1380 = vmatprep.subr.mxu0 0.0
          %1381 = vmatpush2.msra.mxu0 %v1203
          %1382 = vmatprep.subr.mxu0 0.0
          %1383 = vmatpush2.msra.mxu0 %v1202
          %1384 = vmatprep.subr.mxu0 0.0
          %1385 = vmatpush2.msra.mxu0 %v1201
          %1386 = vmatprep.subr.mxu0 0.0
          %1387 = vmatpush2.msra.mxu0 %v1200
          %1388 = vmatprep.subr.mxu0 0.0
          %1389 = vmatpush2.msra.mxu0 %v1199
          %1390 = vmatprep.subr.mxu0 0.0
          %1391 = vmatpush2.msra.mxu0 %v1198
          %1392 = vmatprep.subr.mxu0 0.0
          %1393 = vmatpush2.msra.mxu0 %v1197
          %1394 = vmatprep.subr.mxu0 0.0
          %1395 = vmatpush2.msra.mxu0 %v1196
          %1396 = vmatprep.mubr.f32.mxu0 %v1107
          %1397 = vmatmul.mubr.f32.gmra.mxu0 %v1106
          %v1398 = vpop.f32.mrf.mxu0
          %v1399 = vadd.f32 %v1330, %v1398
          %v1400 = vpop.f32.mrf.mxu0
          %1401 = vmatprep.mubr.f32.mxu0 %v1116
          %1402 = vmatmul.mubr.f32.gmra.mxu0 %v1115
          %v1403 = vpop.f32.mrf.mxu0
          %v1404 = vadd.f32 %v1330, %v1403
          %v1405 = vpop.f32.mrf.mxu0
          %1406 = vmatprep.mubr.f32.mxu0 %v1125
          %1407 = vmatmul.mubr.f32.gmra.mxu0 %v1124
          %v1408 = vpop.f32.mrf.mxu0
          %v1409 = vadd.f32 %v1330, %v1408
          %v1410 = vpop.f32.mrf.mxu0
          %1411 = vmatprep.mubr.f32.mxu0 %v1134
          %1412 = vmatmul.mubr.f32.gmra.mxu0 %v1133
          %v1413 = vpop.f32.mrf.mxu0
          %v1414 = vadd.f32 %v1330, %v1413
          %v1415 = vpop.f32.mrf.mxu0
          %1416 = vmatprep.mubr.f32.mxu0 %v1143
          %1417 = vmatmul.mubr.f32.gmra.mxu0 %v1142
          %v1418 = vpop.f32.mrf.mxu0
          %v1419 = vadd.f32 %v1330, %v1418
          %v1420 = vpop.f32.mrf.mxu0
          %1421 = vmatprep.mubr.f32.mxu0 %v1152
          %1422 = vmatmul.mubr.f32.gmra.mxu0 %v1151
          %v1423 = vpop.f32.mrf.mxu0
          %v1424 = vadd.f32 %v1330, %v1423
          %v1425 = vpop.f32.mrf.mxu0
          %1426 = vmatprep.mubr.f32.mxu0 %v1161
          %1427 = vmatmul.mubr.f32.gmra.mxu0 %v1160
          %v1428 = vpop.f32.mrf.mxu0
          %v1429 = vadd.f32 %v1330, %v1428
          %v1430 = vpop.f32.mrf.mxu0
          %1431 = vmatprep.mubr.f32.mxu0 %v1170
          %1432 = vmatmul.mubr.f32.gmra.mxu0 %v1169
          %v1433 = vpop.f32.mrf.mxu0
          %v1434 = vadd.f32 %v1330, %v1433
          %v1435 = vpop.f32.mrf.mxu0
          %1436 = vdwg.mxu0
          %1437 = vmatprep.subr.mxu0 0.0
          %1438 = vmatpush1.msra.mxu0 %v1227
          %1439 = vmatprep.subr.mxu0 0.0
          %1440 = vmatpush1.msra.mxu0 %v1226
          %1441 = vmatprep.subr.mxu0 0.0
          %1442 = vmatpush1.msra.mxu0 %v1225
          %1443 = vmatprep.subr.mxu0 0.0
          %1444 = vmatpush1.msra.mxu0 %v1224
          %1445 = vmatprep.subr.mxu0 0.0
          %1446 = vmatpush1.msra.mxu0 %v1223
          %1447 = vmatprep.subr.mxu0 0.0
          %1448 = vmatpush1.msra.mxu0 %v1222
          %1449 = vmatprep.subr.mxu0 0.0
          %1450 = vmatpush1.msra.mxu0 %v1221
          %1451 = vmatprep.subr.mxu0 0.0
          %1452 = vmatpush1.msra.mxu0 %v1220
          %1453 = vmatprep.subr.mxu0 0.0
          %1454 = vmatpush1.msra.mxu0 %v1219
          %1455 = vmatprep.subr.mxu0 0.0
          %1456 = vmatpush1.msra.mxu0 %v1218
          %1457 = vmatprep.subr.mxu0 0.0
          %1458 = vmatpush1.msra.mxu0 %v1217
          %1459 = vmatprep.subr.mxu0 0.0
          %1460 = vmatpush1.msra.mxu0 %v1216
          %1461 = vmatprep.subr.mxu0 0.0
          %1462 = vmatpush1.msra.mxu0 %v1215
          %1463 = vmatprep.subr.mxu0 0.0
          %1464 = vmatpush1.msra.mxu0 %v1214
          %1465 = vmatprep.subr.mxu0 0.0
          %1466 = vmatpush1.msra.mxu0 %v1213
          %1467 = vmatprep.subr.mxu0 0.0
          %1468 = vmatpush1.msra.mxu0 %v1212
          %1469 = vmatprep.subr.mxu0 0.0
          %1470 = vmatpush2.msra.mxu0 %v1243
          %1471 = vmatprep.subr.mxu0 0.0
          %1472 = vmatpush2.msra.mxu0 %v1242
          %1473 = vmatprep.subr.mxu0 0.0
          %1474 = vmatpush2.msra.mxu0 %v1241
          %1475 = vmatprep.subr.mxu0 0.0
          %1476 = vmatpush2.msra.mxu0 %v1240
          %1477 = vmatprep.subr.mxu0 0.0
          %1478 = vmatpush2.msra.mxu0 %v1239
          %1479 = vmatprep.subr.mxu0 0.0
          %1480 = vmatpush2.msra.mxu0 %v1238
          %1481 = vmatprep.subr.mxu0 0.0
          %1482 = vmatpush2.msra.mxu0 %v1237
          %1483 = vmatprep.subr.mxu0 0.0
          %1484 = vmatpush2.msra.mxu0 %v1236
          %1485 = vmatprep.subr.mxu0 0.0
          %1486 = vmatpush2.msra.mxu0 %v1235
          %1487 = vmatprep.subr.mxu0 0.0
          %1488 = vmatpush2.msra.mxu0 %v1234
          %1489 = vmatprep.subr.mxu0 0.0
          %1490 = vmatpush2.msra.mxu0 %v1233
          %1491 = vmatprep.subr.mxu0 0.0
          %1492 = vmatpush2.msra.mxu0 %v1232
          %1493 = vmatprep.subr.mxu0 0.0
          %1494 = vmatpush2.msra.mxu0 %v1231
          %1495 = vmatprep.subr.mxu0 0.0
          %1496 = vmatpush2.msra.mxu0 %v1230
          %1497 = vmatprep.subr.mxu0 0.0
          %1498 = vmatpush2.msra.mxu0 %v1229
          %1499 = vmatprep.subr.mxu0 0.0
          %1500 = vmatpush2.msra.mxu0 %v1228
          %1501 = vmatprep.mubr.f32.mxu0 %v1109
          %1502 = vmatmul.mubr.f32.gmra.mxu0 %v1108
          %v1503 = vpop.f32.mrf.mxu0
          %v1504 = vadd.f32 %v1399, %v1503
          %v1505 = vpop.f32.mrf.mxu0
          %1506 = vmatprep.mubr.f32.mxu0 %v1118
          %1507 = vmatmul.mubr.f32.gmra.mxu0 %v1117
          %v1508 = vpop.f32.mrf.mxu0
          %v1509 = vadd.f32 %v1404, %v1508
          %v1510 = vpop.f32.mrf.mxu0
          %1511 = vmatprep.mubr.f32.mxu0 %v1127
          %1512 = vmatmul.mubr.f32.gmra.mxu0 %v1126
          %v1513 = vpop.f32.mrf.mxu0
          %v1514 = vadd.f32 %v1409, %v1513
          %v1515 = vpop.f32.mrf.mxu0
          %1516 = vmatprep.mubr.f32.mxu0 %v1136
          %1517 = vmatmul.mubr.f32.gmra.mxu0 %v1135
          %v1518 = vpop.f32.mrf.mxu0
          %v1519 = vadd.f32 %v1414, %v1518
          %v1520 = vpop.f32.mrf.mxu0
          %1521 = vmatprep.mubr.f32.mxu0 %v1145
          %1522 = vmatmul.mubr.f32.gmra.mxu0 %v1144
          %v1523 = vpop.f32.mrf.mxu0
          %v1524 = vadd.f32 %v1419, %v1523
          %v1525 = vpop.f32.mrf.mxu0
          %1526 = vmatprep.mubr.f32.mxu0 %v1154
          %1527 = vmatmul.mubr.f32.gmra.mxu0 %v1153
          %v1528 = vpop.f32.mrf.mxu0
          %v1529 = vadd.f32 %v1424, %v1528
          %v1530 = vpop.f32.mrf.mxu0
          %1531 = vmatprep.mubr.f32.mxu0 %v1163
          %1532 = vmatmul.mubr.f32.gmra.mxu0 %v1162
          %v1533 = vpop.f32.mrf.mxu0
          %v1534 = vadd.f32 %v1429, %v1533
          %v1535 = vpop.f32.mrf.mxu0
          %1536 = vmatprep.mubr.f32.mxu0 %v1172
          %1537 = vmatmul.mubr.f32.gmra.mxu0 %v1171
          %v1538 = vpop.f32.mrf.mxu0
          %v1539 = vadd.f32 %v1434, %v1538
          %v1540 = vpop.f32.mrf.mxu0
          %1541 = vdwg.mxu0
          %1542 = vmatprep.subr.mxu0 0.0
          %1543 = vmatpush1.msra.mxu0 %v1259
          %1544 = vmatprep.subr.mxu0 0.0
          %1545 = vmatpush1.msra.mxu0 %v1258
          %1546 = vmatprep.subr.mxu0 0.0
          %1547 = vmatpush1.msra.mxu0 %v1257
          %1548 = vmatprep.subr.mxu0 0.0
          %1549 = vmatpush1.msra.mxu0 %v1256
          %1550 = vmatprep.subr.mxu0 0.0
          %1551 = vmatpush1.msra.mxu0 %v1255
          %1552 = vmatprep.subr.mxu0 0.0
          %1553 = vmatpush1.msra.mxu0 %v1254
          %1554 = vmatprep.subr.mxu0 0.0
          %1555 = vmatpush1.msra.mxu0 %v1253
          %1556 = vmatprep.subr.mxu0 0.0
          %1557 = vmatpush1.msra.mxu0 %v1252
          %1558 = vmatprep.subr.mxu0 0.0
          %1559 = vmatpush1.msra.mxu0 %v1251
          %1560 = vmatprep.subr.mxu0 0.0
          %1561 = vmatpush1.msra.mxu0 %v1250
          %1562 = vmatprep.subr.mxu0 0.0
          %1563 = vmatpush1.msra.mxu0 %v1249
          %1564 = vmatprep.subr.mxu0 0.0
          %1565 = vmatpush1.msra.mxu0 %v1248
          %1566 = vmatprep.subr.mxu0 0.0
          %1567 = vmatpush1.msra.mxu0 %v1247
          %1568 = vmatprep.subr.mxu0 0.0
          %1569 = vmatpush1.msra.mxu0 %v1246
          %1570 = vmatprep.subr.mxu0 0.0
          %1571 = vmatpush1.msra.mxu0 %v1245
          %1572 = vmatprep.subr.mxu0 0.0
          %1573 = vmatpush1.msra.mxu0 %v1244
          %1574 = vmatprep.subr.mxu0 0.0
          %1575 = vmatpush2.msra.mxu0 %v1275
          %1576 = vmatprep.subr.mxu0 0.0
          %1577 = vmatpush2.msra.mxu0 %v1274
          %1578 = vmatprep.subr.mxu0 0.0
          %1579 = vmatpush2.msra.mxu0 %v1273
          %1580 = vmatprep.subr.mxu0 0.0
          %1581 = vmatpush2.msra.mxu0 %v1272
          %1582 = vmatprep.subr.mxu0 0.0
          %1583 = vmatpush2.msra.mxu0 %v1271
          %1584 = vmatprep.subr.mxu0 0.0
          %1585 = vmatpush2.msra.mxu0 %v1270
          %1586 = vmatprep.subr.mxu0 0.0
          %1587 = vmatpush2.msra.mxu0 %v1269
          %1588 = vmatprep.subr.mxu0 0.0
          %1589 = vmatpush2.msra.mxu0 %v1268
          %1590 = vmatprep.subr.mxu0 0.0
          %1591 = vmatpush2.msra.mxu0 %v1267
          %1592 = vmatprep.subr.mxu0 0.0
          %1593 = vmatpush2.msra.mxu0 %v1266
          %1594 = vmatprep.subr.mxu0 0.0
          %1595 = vmatpush2.msra.mxu0 %v1265
          %1596 = vmatprep.subr.mxu0 0.0
          %1597 = vmatpush2.msra.mxu0 %v1264
          %1598 = vmatprep.subr.mxu0 0.0
          %1599 = vmatpush2.msra.mxu0 %v1263
          %1600 = vmatprep.subr.mxu0 0.0
          %1601 = vmatpush2.msra.mxu0 %v1262
          %1602 = vmatprep.subr.mxu0 0.0
          %1603 = vmatpush2.msra.mxu0 %v1261
          %1604 = vmatprep.subr.mxu0 0.0
          %1605 = vmatpush2.msra.mxu0 %v1260
          %1606 = vmatprep.mubr.f32.mxu0 %v1111
          %1607 = vmatmul.mubr.f32.gmra.mxu0 %v1110
          %v1608 = vpop.f32.mrf.mxu0
          %v1609 = vadd.f32 %v1504, %v1608
          %v1610 = vpop.f32.mrf.mxu0
          %1611 = vmatprep.mubr.f32.mxu0 %v1120
          %1612 = vmatmul.mubr.f32.gmra.mxu0 %v1119
          %v1613 = vpop.f32.mrf.mxu0
          %v1614 = vadd.f32 %v1509, %v1613
          %v1615 = vpop.f32.mrf.mxu0
          %1616 = vmatprep.mubr.f32.mxu0 %v1129
          %1617 = vmatmul.mubr.f32.gmra.mxu0 %v1128
          %v1618 = vpop.f32.mrf.mxu0
          %v1619 = vadd.f32 %v1514, %v1618
          %v1620 = vpop.f32.mrf.mxu0
          %1621 = vmatprep.mubr.f32.mxu0 %v1138
          %1622 = vmatmul.mubr.f32.gmra.mxu0 %v1137
          %v1623 = vpop.f32.mrf.mxu0
          %v1624 = vadd.f32 %v1519, %v1623
          %v1625 = vpop.f32.mrf.mxu0
          %1626 = vmatprep.mubr.f32.mxu0 %v1147
          %1627 = vmatmul.mubr.f32.gmra.mxu0 %v1146
          %v1628 = vpop.f32.mrf.mxu0
          %v1629 = vadd.f32 %v1524, %v1628
          %v1630 = vpop.f32.mrf.mxu0
          %1631 = vmatprep.mubr.f32.mxu0 %v1156
          %1632 = vmatmul.mubr.f32.gmra.mxu0 %v1155
          %v1633 = vpop.f32.mrf.mxu0
          %v1634 = vadd.f32 %v1529, %v1633
          %v1635 = vpop.f32.mrf.mxu0
          %1636 = vmatprep.mubr.f32.mxu0 %v1165
          %1637 = vmatmul.mubr.f32.gmra.mxu0 %v1164
          %v1638 = vpop.f32.mrf.mxu0
          %v1639 = vadd.f32 %v1534, %v1638
          %v1640 = vpop.f32.mrf.mxu0
          %1641 = vmatprep.mubr.f32.mxu0 %v1174
          %1642 = vmatmul.mubr.f32.gmra.mxu0 %v1173
          %v1643 = vpop.f32.mrf.mxu0
          %v1644 = vadd.f32 %v1539, %v1643
          %v1645 = vpop.f32.mrf.mxu0
          %1646 = vdwg.mxu0
          %1647 = vmatprep.subr.mxu0 0.0
          %1648 = vmatpush1.msra.mxu0 %v1291
          %1649 = vmatprep.subr.mxu0 0.0
          %1650 = vmatpush1.msra.mxu0 %v1290
          %1651 = vmatprep.subr.mxu0 0.0
          %1652 = vmatpush1.msra.mxu0 %v1289
          %1653 = vmatprep.subr.mxu0 0.0
          %1654 = vmatpush1.msra.mxu0 %v1288
          %1655 = vmatprep.subr.mxu0 0.0
          %1656 = vmatpush1.msra.mxu0 %v1287
          %1657 = vmatprep.subr.mxu0 0.0
          %1658 = vmatpush1.msra.mxu0 %v1286
          %1659 = vmatprep.subr.mxu0 0.0
          %1660 = vmatpush1.msra.mxu0 %v1285
          %1661 = vmatprep.subr.mxu0 0.0
          %1662 = vmatpush1.msra.mxu0 %v1284
          %1663 = vmatprep.subr.mxu0 0.0
          %1664 = vmatpush1.msra.mxu0 %v1283
          %1665 = vmatprep.subr.mxu0 0.0
          %1666 = vmatpush1.msra.mxu0 %v1282
          %1667 = vmatprep.subr.mxu0 0.0
          %1668 = vmatpush1.msra.mxu0 %v1281
          %1669 = vmatprep.subr.mxu0 0.0
          %1670 = vmatpush1.msra.mxu0 %v1280
          %1671 = vmatprep.subr.mxu0 0.0
          %1672 = vmatpush1.msra.mxu0 %v1279
          %1673 = vmatprep.subr.mxu0 0.0
          %1674 = vmatpush1.msra.mxu0 %v1278
          %1675 = vmatprep.subr.mxu0 0.0
          %1676 = vmatpush1.msra.mxu0 %v1277
          %1677 = vmatprep.subr.mxu0 0.0
          %1678 = vmatpush1.msra.mxu0 %v1276
          %1679 = vmatprep.subr.mxu0 0.0
          %1680 = vmatpush2.msra.mxu0 %v1307
          %1681 = vmatprep.subr.mxu0 0.0
          %1682 = vmatpush2.msra.mxu0 %v1306
          %1683 = vmatprep.subr.mxu0 0.0
          %1684 = vmatpush2.msra.mxu0 %v1305
          %1685 = vmatprep.subr.mxu0 0.0
          %1686 = vmatpush2.msra.mxu0 %v1304
          %1687 = vmatprep.subr.mxu0 0.0
          %1688 = vmatpush2.msra.mxu0 %v1303
          %1689 = vmatprep.subr.mxu0 0.0
          %1690 = vmatpush2.msra.mxu0 %v1302
          %1691 = vmatprep.subr.mxu0 0.0
          %1692 = vmatpush2.msra.mxu0 %v1301
          %1693 = vmatprep.subr.mxu0 0.0
          %1694 = vmatpush2.msra.mxu0 %v1300
          %1695 = vmatprep.subr.mxu0 0.0
          %1696 = vmatpush2.msra.mxu0 %v1299
          %1697 = vmatprep.subr.mxu0 0.0
          %1698 = vmatpush2.msra.mxu0 %v1298
          %1699 = vmatprep.subr.mxu0 0.0
          %1700 = vmatpush2.msra.mxu0 %v1297
          %1701 = vmatprep.subr.mxu0 0.0
          %1702 = vmatpush2.msra.mxu0 %v1296
          %1703 = vmatprep.subr.mxu0 0.0
          %1704 = vmatpush2.msra.mxu0 %v1295
          %1705 = vmatprep.subr.mxu0 0.0
          %1706 = vmatpush2.msra.mxu0 %v1294
          %1707 = vmatprep.subr.mxu0 0.0
          %1708 = vmatpush2.msra.mxu0 %v1293
          %1709 = vmatprep.subr.mxu0 0.0
          %1710 = vmatpush2.msra.mxu0 %v1292
          %1711 = vmatprep.mubr.f32.mxu0 %v1113
          %1712 = vmatmul.mubr.f32.gmra.mxu0 %v1112
          %v1713 = vpop.f32.mrf.mxu0
          %v1714 = vadd.f32 %v1609, %v1713
          %v1715 = vpop.f32.mrf.mxu0
          %1716 = vmatprep.mubr.f32.mxu0 %v1122
          %1717 = vmatmul.mubr.f32.gmra.mxu0 %v1121
          %v1718 = vpop.f32.mrf.mxu0
          %v1719 = vadd.f32 %v1614, %v1718
          %v1720 = vpop.f32.mrf.mxu0
          %1721 = vmatprep.mubr.f32.mxu0 %v1131
          %1722 = vmatmul.mubr.f32.gmra.mxu0 %v1130
          %v1723 = vpop.f32.mrf.mxu0
          %v1724 = vadd.f32 %v1619, %v1723
          %v1725 = vpop.f32.mrf.mxu0
          %1726 = vmatprep.mubr.f32.mxu0 %v1140
          %1727 = vmatmul.mubr.f32.gmra.mxu0 %v1139
          %v1728 = vpop.f32.mrf.mxu0
          %v1729 = vadd.f32 %v1624, %v1728
          %v1730 = vpop.f32.mrf.mxu0
          %1731 = vmatprep.mubr.f32.mxu0 %v1149
          %1732 = vmatmul.mubr.f32.gmra.mxu0 %v1148
          %v1733 = vpop.f32.mrf.mxu0
          %v1734 = vadd.f32 %v1629, %v1733
          %v1735 = vpop.f32.mrf.mxu0
          %1736 = vmatprep.mubr.f32.mxu0 %v1158
          %1737 = vmatmul.mubr.f32.gmra.mxu0 %v1157
          %v1738 = vpop.f32.mrf.mxu0
          %v1739 = vadd.f32 %v1634, %v1738
          %v1740 = vpop.f32.mrf.mxu0
          %1741 = vmatprep.mubr.f32.mxu0 %v1167
          %1742 = vmatmul.mubr.f32.gmra.mxu0 %v1166
          %v1743 = vpop.f32.mrf.mxu0
          %v1744 = vadd.f32 %v1639, %v1743
          %v1745 = vpop.f32.mrf.mxu0
          %1746 = vmatprep.mubr.f32.mxu0 %v1176
          %1747 = vmatmul.mubr.f32.gmra.mxu0 %v1175
          %v1748 = vpop.f32.mrf.mxu0
          %v1749 = vadd.f32 %v1644, %v1748
          %v1750 = vpop.f32.mrf.mxu0
          %1751 = vdwg.mxu0
          %1752 = vmatprep.subr.mxu0 0.0
          %1753 = vmatpush1.msra.mxu0 %v1323
          %1754 = vmatprep.subr.mxu0 0.0
          %1755 = vmatpush1.msra.mxu0 %v1322
          %1756 = vmatprep.subr.mxu0 0.0
          %1757 = vmatpush1.msra.mxu0 %v1321
          %1758 = vmatprep.subr.mxu0 0.0
          %1759 = vmatpush1.msra.mxu0 %v1320
          %1760 = vmatprep.subr.mxu0 0.0
          %1761 = vmatpush1.msra.mxu0 %v1319
          %1762 = vmatprep.subr.mxu0 0.0
          %1763 = vmatpush1.msra.mxu0 %v1318
          %1764 = vmatprep.subr.mxu0 0.0
          %1765 = vmatpush1.msra.mxu0 %v1317
          %1766 = vmatprep.subr.mxu0 0.0
          %1767 = vmatpush1.msra.mxu0 %v1316
          %1768 = vmatprep.subr.mxu0 0.0
          %1769 = vmatpush1.msra.mxu0 %v1315
          %1770 = vmatprep.subr.mxu0 0.0
          %1771 = vmatpush1.msra.mxu0 %v1314
          %1772 = vmatprep.subr.mxu0 0.0
          %1773 = vmatpush1.msra.mxu0 %v1313
          %1774 = vmatprep.subr.mxu0 0.0
          %1775 = vmatpush1.msra.mxu0 %v1312
          %1776 = vmatprep.subr.mxu0 0.0
          %1777 = vmatpush1.msra.mxu0 %v1311
          %1778 = vmatprep.subr.mxu0 0.0
          %1779 = vmatpush1.msra.mxu0 %v1310
          %1780 = vmatprep.subr.mxu0 0.0
          %1781 = vmatpush1.msra.mxu0 %v1309
          %1782 = vmatprep.subr.mxu0 0.0
          %1783 = vmatpush1.msra.mxu0 %v1308
          %1784 = vmatprep.subr.mxu0 0.0
          %1785 = vmatpush2.msra.mxu0 0.0
          %1786 = vmatprep.subr.mxu0 0.0
          %1787 = vmatpush2.msra.mxu0 0.0
          %1788 = vmatprep.subr.mxu0 0.0
          %1789 = vmatpush2.msra.mxu0 0.0
          %1790 = vmatprep.subr.mxu0 0.0
          %1791 = vmatpush2.msra.mxu0 0.0
          %1792 = vmatprep.subr.mxu0 0.0
          %1793 = vmatpush2.msra.mxu0 0.0
          %1794 = vmatprep.subr.mxu0 0.0
          %1795 = vmatpush2.msra.mxu0 0.0
          %1796 = vmatprep.subr.mxu0 0.0
          %1797 = vmatpush2.msra.mxu0 0.0
          %1798 = vmatprep.subr.mxu0 0.0
          %1799 = vmatpush2.msra.mxu0 0.0
          %1800 = vmatprep.subr.mxu0 0.0
          %1801 = vmatpush2.msra.mxu0 0.0
          %1802 = vmatprep.subr.mxu0 0.0
          %1803 = vmatpush2.msra.mxu0 0.0
          %1804 = vmatprep.subr.mxu0 0.0
          %1805 = vmatpush2.msra.mxu0 0.0
          %1806 = vmatprep.subr.mxu0 0.0
          %1807 = vmatpush2.msra.mxu0 0.0
          %1808 = vmatprep.subr.mxu0 0.0
          %1809 = vmatpush2.msra.mxu0 0.0
          %1810 = vmatprep.subr.mxu0 0.0
          %1811 = vmatpush2.msra.mxu0 0.0
          %1812 = vmatprep.subr.mxu0 0.0
          %1813 = vmatpush2.msra.mxu0 0.0
          %1814 = vmatprep.subr.mxu0 0.0
          %1815 = vmatpush2.msra.mxu0 0.0
          %1816 = vmatprep.mubr.f32.mxu0 0.0
          %1817 = vmatmul.mubr.f32.gmra.mxu0 %v1114
          %v1818 = vpop.f32.mrf.mxu0
          %v1819 = vadd.f32 %v1714, %v1818
          %v1820 = vpop.f32.mrf.mxu0
          %1821 = vmatprep.mubr.f32.mxu0 0.0
          %1822 = vmatmul.mubr.f32.gmra.mxu0 %v1123
          %v1823 = vpop.f32.mrf.mxu0
          %v1824 = vadd.f32 %v1719, %v1823
          %v1825 = vpop.f32.mrf.mxu0
          %1826 = vmatprep.mubr.f32.mxu0 0.0
          %1827 = vmatmul.mubr.f32.gmra.mxu0 %v1132
          %v1828 = vpop.f32.mrf.mxu0
          %v1829 = vadd.f32 %v1724, %v1828
          %v1830 = vpop.f32.mrf.mxu0
          %1831 = vmatprep.mubr.f32.mxu0 0.0
          %1832 = vmatmul.mubr.f32.gmra.mxu0 %v1141
          %v1833 = vpop.f32.mrf.mxu0
          %v1834 = vadd.f32 %v1729, %v1833
          %v1835 = vpop.f32.mrf.mxu0
          %1836 = vmatprep.mubr.f32.mxu0 0.0
          %1837 = vmatmul.mubr.f32.gmra.mxu0 %v1150
          %v1838 = vpop.f32.mrf.mxu0
          %v1839 = vadd.f32 %v1734, %v1838
          %v1840 = vpop.f32.mrf.mxu0
          %1841 = vmatprep.mubr.f32.mxu0 0.0
          %1842 = vmatmul.mubr.f32.gmra.mxu0 %v1159
          %v1843 = vpop.f32.mrf.mxu0
          %v1844 = vadd.f32 %v1739, %v1843
          %v1845 = vpop.f32.mrf.mxu0
          %1846 = vmatprep.mubr.f32.mxu0 0.0
          %1847 = vmatmul.mubr.f32.gmra.mxu0 %v1168
          %v1848 = vpop.f32.mrf.mxu0
          %v1849 = vadd.f32 %v1744, %v1848
          %v1850 = vpop.f32.mrf.mxu0
          %1851 = vmatprep.mubr.f32.mxu0 0.0
          %1852 = vmatmul.mubr.f32.gmra.mxu0 %v1177
          %v1853 = vpop.f32.mrf.mxu0
          %v1854 = vadd.f32 %v1749, %v1853
          %v1855 = vpop.f32.mrf.mxu0
          %1856 = vdwg.mxu0
          %v1857 = vmax.f32 %v1819, 0.0
          %v1858 = vmax.f32 %v1824, 0.0
          %v1859 = vmax.f32 %v1829, 0.0
          %v1860 = vmax.f32 %v1834, 0.0
          %v1861 = vmax.f32 %v1839, 0.0
          %v1862 = vmax.f32 %v1844, 0.0
          %v1863 = vmax.f32 %v1849, 0.0
          %v1864 = vmax.f32 %v1854, 0.0
          %s1865 = smul.u32 %s891, 128
          %s1866 = scalar_lea.vmem [#allocation11], %s1865
          %v1867 = vld [vmem:[%s1866] sm:$0xff]
          %v1868 = vld [vmem:[%s1866 + $0x8] sm:$0xff]
          %v1869 = vld [vmem:[%s1866 + $0x10] sm:$0xff]
          %v1870 = vld [vmem:[%s1866 + $0x18] sm:$0xff]
          %v1871 = vld [vmem:[%s1866 + $0x20] sm:$0xff]
          %v1872 = vld [vmem:[%s1866 + $0x28] sm:$0xff]
          %v1873 = vld [vmem:[%s1866 + $0x30] sm:$0xff]
          %v1874 = vld [vmem:[%s1866 + $0x38] sm:$0xff]
          %v1875 = vld [vmem:[%s1866 + $0x40] sm:$0xff]
          %v1876 = vld [vmem:[%s1866 + $0x48] sm:$0xff]
          %v1877 = vld [vmem:[%s1866 + $0x50] sm:$0xff]
          %v1878 = vld [vmem:[%s1866 + $0x58] sm:$0xff]
          %v1879 = vld [vmem:[%s1866 + $0x60] sm:$0xff]
          %v1880 = vld [vmem:[%s1866 + $0x68] sm:$0xff]
          %v1881 = vld [vmem:[%s1866 + $0x70] sm:$0xff]
          %v1882 = vld [vmem:[%s1866 + $0x78] sm:$0xff]
          %s1883 = scalar_lea.vmem [#allocation12], %s891
          %v1884 = vld [vmem:[%s1883] sm:$0x1]
          %v1886 = vlaneseq
          %v1887 = vshrl.u32 %v1886, 7
          %v1888 = vsub.s32 0, %v1887
          %v1889 = vrot.slane %v1884, %v1888
          %1891 = vmatprep.subr.mxu0 0.0
          %1892 = vmatpush1.msra.mxu0 %v1882
          %1893 = vmatprep.subr.mxu0 0.0
          %1894 = vmatpush1.msra.mxu0 %v1881
          %1895 = vmatprep.subr.mxu0 0.0
          %1896 = vmatpush1.msra.mxu0 %v1880
          %1897 = vmatprep.subr.mxu0 0.0
          %1898 = vmatpush1.msra.mxu0 %v1879
          %1899 = vmatprep.subr.mxu0 0.0
          %1900 = vmatpush1.msra.mxu0 %v1878
          %1901 = vmatprep.subr.mxu0 0.0
          %1902 = vmatpush1.msra.mxu0 %v1877
          %1903 = vmatprep.subr.mxu0 0.0
          %1904 = vmatpush1.msra.mxu0 %v1876
          %1905 = vmatprep.subr.mxu0 0.0
          %1906 = vmatpush1.msra.mxu0 %v1875
          %1907 = vmatprep.subr.mxu0 0.0
          %1908 = vmatpush1.msra.mxu0 %v1874
          %1909 = vmatprep.subr.mxu0 0.0
          %1910 = vmatpush1.msra.mxu0 %v1873
          %1911 = vmatprep.subr.mxu0 0.0
          %1912 = vmatpush1.msra.mxu0 %v1872
          %1913 = vmatprep.subr.mxu0 0.0
          %1914 = vmatpush1.msra.mxu0 %v1871
          %1915 = vmatprep.subr.mxu0 0.0
          %1916 = vmatpush1.msra.mxu0 %v1870
          %1917 = vmatprep.subr.mxu0 0.0
          %1918 = vmatpush1.msra.mxu0 %v1869
          %1919 = vmatprep.subr.mxu0 0.0
          %1920 = vmatpush1.msra.mxu0 %v1868
          %1921 = vmatprep.subr.mxu0 0.0
          %1922 = vmatpush1.msra.mxu0 %v1867
          %1923 = vmatprep.subr.mxu0 0.0
          %1924 = vmatpush2.msra.mxu0 0.0
          %1925 = vmatprep.subr.mxu0 0.0
          %1926 = vmatpush2.msra.mxu0 0.0
          %1927 = vmatprep.subr.mxu0 0.0
          %1928 = vmatpush2.msra.mxu0 0.0
          %1929 = vmatprep.subr.mxu0 0.0
          %1930 = vmatpush2.msra.mxu0 0.0
          %1931 = vmatprep.subr.mxu0 0.0
          %1932 = vmatpush2.msra.mxu0 0.0
          %1933 = vmatprep.subr.mxu0 0.0
          %1934 = vmatpush2.msra.mxu0 0.0
          %1935 = vmatprep.subr.mxu0 0.0
          %1936 = vmatpush2.msra.mxu0 0.0
          %1937 = vmatprep.subr.mxu0 0.0
          %1938 = vmatpush2.msra.mxu0 0.0
          %1939 = vmatprep.subr.mxu0 0.0
          %1940 = vmatpush2.msra.mxu0 0.0
          %1941 = vmatprep.subr.mxu0 0.0
          %1942 = vmatpush2.msra.mxu0 0.0
          %1943 = vmatprep.subr.mxu0 0.0
          %1944 = vmatpush2.msra.mxu0 0.0
          %1945 = vmatprep.subr.mxu0 0.0
          %1946 = vmatpush2.msra.mxu0 0.0
          %1947 = vmatprep.subr.mxu0 0.0
          %1948 = vmatpush2.msra.mxu0 0.0
          %1949 = vmatprep.subr.mxu0 0.0
          %1950 = vmatpush2.msra.mxu0 0.0
          %1951 = vmatprep.subr.mxu0 0.0
          %1952 = vmatpush2.msra.mxu0 0.0
          %1953 = vmatprep.subr.mxu0 0.0
          %1954 = vmatpush2.msra.mxu0 0.0
          %1955 = vmatprep.mubr.f32.mxu0 0.0
          %1956 = vmatmul.mubr.f32.gmra.mxu0 %v1857
          %v1957 = vpop.f32.mrf.mxu0
          %v1958 = vadd.f32 %v1889, %v1957
          %v1959 = vpop.f32.mrf.mxu0
          %1960 = vmatprep.mubr.f32.mxu0 0.0
          %1961 = vmatmul.mubr.f32.gmra.mxu0 %v1858
          %v1962 = vpop.f32.mrf.mxu0
          %v1963 = vadd.f32 %v1889, %v1962
          %v1964 = vpop.f32.mrf.mxu0
          %1965 = vmatprep.mubr.f32.mxu0 0.0
          %1966 = vmatmul.mubr.f32.gmra.mxu0 %v1859
          %v1967 = vpop.f32.mrf.mxu0
          %v1968 = vadd.f32 %v1889, %v1967
          %v1969 = vpop.f32.mrf.mxu0
          %1970 = vmatprep.mubr.f32.mxu0 0.0
          %1971 = vmatmul.mubr.f32.gmra.mxu0 %v1860
          %v1972 = vpop.f32.mrf.mxu0
          %v1973 = vadd.f32 %v1889, %v1972
          %v1974 = vpop.f32.mrf.mxu0
          %1975 = vmatprep.mubr.f32.mxu0 0.0
          %1976 = vmatmul.mubr.f32.gmra.mxu0 %v1861
          %v1977 = vpop.f32.mrf.mxu0
          %v1978 = vadd.f32 %v1889, %v1977
          %v1979 = vpop.f32.mrf.mxu0
          %1980 = vmatprep.mubr.f32.mxu0 0.0
          %1981 = vmatmul.mubr.f32.gmra.mxu0 %v1862
          %v1982 = vpop.f32.mrf.mxu0
          %v1983 = vadd.f32 %v1889, %v1982
          %v1984 = vpop.f32.mrf.mxu0
          %1985 = vmatprep.mubr.f32.mxu0 0.0
          %1986 = vmatmul.mubr.f32.gmra.mxu0 %v1863
          %v1987 = vpop.f32.mrf.mxu0
          %v1988 = vadd.f32 %v1889, %v1987
          %v1989 = vpop.f32.mrf.mxu0
          %1990 = vmatprep.mubr.f32.mxu0 0.0
          %1991 = vmatmul.mubr.f32.gmra.mxu0 %v1864
          %v1992 = vpop.f32.mrf.mxu0
          %v1993 = vadd.f32 %v1889, %v1992
          %v1994 = vpop.f32.mrf.mxu0
          %1995 = vdwg.mxu0
          %v1996 = vmax.f32 %v1958, 0.0
          %v1997 = vmax.f32 %v1963, 0.0
          %v1998 = vmax.f32 %v1968, 0.0
          %v1999 = vmax.f32 %v1973, 0.0
          %v2000 = vmax.f32 %v1978, 0.0
          %v2001 = vmax.f32 %v1983, 0.0
          %v2002 = vmax.f32 %v1988, 0.0
          %v2003 = vmax.f32 %v1993, 0.0
        $region93: #{mobilenet_pallas.1} parent=55 // loop_footer
          %s895 = sadd.s32 1, %s891
        $region94: #{mobilenet_pallas.1} parent=55 // loop_footer_branch
          %890 = sbr.rel target = $region90
        $region95: #{mobilenet_pallas.1} parent=55 // loop_exit
          _
        %v2004 = vadd.f32 %v896, %v897
        %v2005 = vadd.f32 %v2004, %v898
        %v2006 = vadd.f32 %v2005, %v899
        %v2007 = vadd.f32 %v2006, %v900
        %v2008 = vadd.f32 %v2007, %v901
        %v2009 = vadd.f32 %v2008, %v902
        %v2010 = vadd.f32 %v2009, %v903
        %v2011 = vrot.slane %v2010, 4
        %v2012 = vadd.f32 %v2010, %v2011
        %v2013 = vrot.slane %v2012, 2
        %v2014 = vadd.f32 %v2012, %v2013
        %v2015 = vrot.slane %v2014, 1
        %v2016 = vadd.f32 %v2014, %v2015
        %v2017 = vrcp.pop 64.0
        %v2018 = vmul.f32 %v2016, %v2017
        %v2019 = vld [vmem:[#allocation14] sm:$0xff]
        %v2020 = vld [vmem:[#allocation14 + $0x8] sm:$0xff]
        %v2021 = vld [vmem:[#allocation14 + $0x10] sm:$0xff]
        %v2022 = vld [vmem:[#allocation14 + $0x18] sm:$0xff]
        %v2023 = vld [vmem:[#allocation14 + $0x20] sm:$0xff]
        %v2024 = vld [vmem:[#allocation14 + $0x28] sm:$0xff]
        %v2025 = vld [vmem:[#allocation14 + $0x30] sm:$0xff]
        %v2026 = vld [vmem:[#allocation14 + $0x38] sm:$0xff]
        %v2027 = vld [vmem:[#allocation14 + $0x40] sm:$0xff]
        %v2028 = vld [vmem:[#allocation14 + $0x48] sm:$0xff]
        %v2029 = vld [vmem:[#allocation14 + $0x50] sm:$0xff]
        %v2030 = vld [vmem:[#allocation14 + $0x58] sm:$0xff]
        %v2031 = vld [vmem:[#allocation14 + $0x60] sm:$0xff]
        %v2032 = vld [vmem:[#allocation14 + $0x68] sm:$0xff]
        %v2033 = vld [vmem:[#allocation14 + $0x70] sm:$0xff]
        %v2034 = vld [vmem:[#allocation14 + $0x78] sm:$0xff]
        %v2035 = vld [vmem:[#allocation15] sm:$0x1]
        %2036 = vmatprep.subr.mxu0 0.0
        %2037 = vmatpush1.msra.mxu0 %v2034
        %2038 = vmatprep.subr.mxu0 0.0
        %2039 = vmatpush1.msra.mxu0 %v2033
        %2040 = vmatprep.subr.mxu0 0.0
        %2041 = vmatpush1.msra.mxu0 %v2032
        %2042 = vmatprep.subr.mxu0 0.0
        %2043 = vmatpush1.msra.mxu0 %v2031
        %2044 = vmatprep.subr.mxu0 0.0
        %2045 = vmatpush1.msra.mxu0 %v2030
        %2046 = vmatprep.subr.mxu0 0.0
        %2047 = vmatpush1.msra.mxu0 %v2029
        %2048 = vmatprep.subr.mxu0 0.0
        %2049 = vmatpush1.msra.mxu0 %v2028
        %2050 = vmatprep.subr.mxu0 0.0
        %2051 = vmatpush1.msra.mxu0 %v2027
        %2052 = vmatprep.subr.mxu0 0.0
        %2053 = vmatpush1.msra.mxu0 %v2026
        %2054 = vmatprep.subr.mxu0 0.0
        %2055 = vmatpush1.msra.mxu0 %v2025
        %2056 = vmatprep.subr.mxu0 0.0
        %2057 = vmatpush1.msra.mxu0 %v2024
        %2058 = vmatprep.subr.mxu0 0.0
        %2059 = vmatpush1.msra.mxu0 %v2023
        %2060 = vmatprep.subr.mxu0 0.0
        %2061 = vmatpush1.msra.mxu0 %v2022
        %2062 = vmatprep.subr.mxu0 0.0
        %2063 = vmatpush1.msra.mxu0 %v2021
        %2064 = vmatprep.subr.mxu0 0.0
        %2065 = vmatpush1.msra.mxu0 %v2020
        %2066 = vmatprep.subr.mxu0 0.0
        %2067 = vmatpush1.msra.mxu0 %v2019
        %2068 = vmatprep.subr.mxu0 0.0
        %2069 = vmatpush2.msra.mxu0 0.0
        %2070 = vmatprep.subr.mxu0 0.0
        %2071 = vmatpush2.msra.mxu0 0.0
        %2072 = vmatprep.subr.mxu0 0.0
        %2073 = vmatpush2.msra.mxu0 0.0
        %2074 = vmatprep.subr.mxu0 0.0
        %2075 = vmatpush2.msra.mxu0 0.0
        %2076 = vmatprep.subr.mxu0 0.0
        %2077 = vmatpush2.msra.mxu0 0.0
        %2078 = vmatprep.subr.mxu0 0.0
        %2079 = vmatpush2.msra.mxu0 0.0
        %2080 = vmatprep.subr.mxu0 0.0
        %2081 = vmatpush2.msra.mxu0 0.0
        %2082 = vmatprep.subr.mxu0 0.0
        %2083 = vmatpush2.msra.mxu0 0.0
        %2084 = vmatprep.subr.mxu0 0.0
        %2085 = vmatpush2.msra.mxu0 0.0
        %2086 = vmatprep.subr.mxu0 0.0
        %2087 = vmatpush2.msra.mxu0 0.0
        %2088 = vmatprep.subr.mxu0 0.0
        %2089 = vmatpush2.msra.mxu0 0.0
        %2090 = vmatprep.subr.mxu0 0.0
        %2091 = vmatpush2.msra.mxu0 0.0
        %2092 = vmatprep.subr.mxu0 0.0
        %2093 = vmatpush2.msra.mxu0 0.0
        %2094 = vmatprep.subr.mxu0 0.0
        %2095 = vmatpush2.msra.mxu0 0.0
        %2096 = vmatprep.subr.mxu0 0.0
        %2097 = vmatpush2.msra.mxu0 0.0
        %2098 = vmatprep.subr.mxu0 0.0
        %2099 = vmatpush2.msra.mxu0 0.0
        %2100 = vmatprep.mubr.f32.mxu0 0.0
        %2101 = vmatmul.mubr.f32.gmra.mxu0 %v2018
        %v2102 = vpop.f32.mrf.mxu0
        %v2103 = vadd.f32 %v2035, %v2102
        %v2104 = vpop.f32.mrf.mxu0
        %2105 = vdwg.mxu0
        %v2106 = vlaneseq
        %v2107 = vshrl.u32 %v2106, 7
        %v2108 = vsub.s32 0, %v2107
        %v2109 = vrot.slane %v2103, %v2108
        %2110 = vst [vmem:[%s443] sm:$0xff] %v2109
        %p2111 = scmp.lt.s32.totalorder %s25, 1
        %s2112 = scalar_select %p2111, %s25, 1
        %s2113 = smul.addr %s2112, 8
        %s2114 = scalar_lea.vmem %s9, %s2113
        // Predicated region
        $region96: #{mobilenet_pallas.1} parent=55 // pred_check
          %p2115 = pneg %p237
        $region97: #{mobilenet_pallas.1} parent=55 // pred_check_branch
          %2117 = sbr.rel (%p2115) target = $region99
        $region98: #{mobilenet_pallas.1} parent=55 // pred_region
          _
        $region99: #{mobilenet_pallas.1} parent=55 // pred_fallthru
          _
      $region56: #{mobilenet_pallas.1} parent=5 // pred_fallthru
        _
      %p2118 = scmp.le.s32.totalorder 2, %s20
      // Predicated region
      $region100: #{mobilenet_pallas.1} parent=5 // pred_check
        %p2119 = pneg %p2118
      $region101: #{mobilenet_pallas.1} parent=5 // pred_check_branch
        %2121 = sbr.rel (%p2119) target = $region103
      $region102: #{mobilenet_pallas.1} parent=5 // pred_region
        %s2122 = ssub.s32 %s20, 2
        // Predicated region
        $region104: #{mobilenet_pallas.1} parent=102 // pred_check
          %p2123 = pneg %p243
        $region105: #{mobilenet_pallas.1} parent=102 // pred_check_branch
          %2125 = sbr.rel (%p2123) target = $region107
        $region106: #{mobilenet_pallas.1} parent=102 // pred_region
          %p2126 = scmp.lt.s32.totalorder %s26, 1
          %s2127 = scalar_select %p2126, %s26, 1
          %s2128 = smul.addr %s2127, 8
          %s2129 = scalar_lea.vmem %s9, %s2128
        $region107: #{mobilenet_pallas.1} parent=102 // pred_fallthru
          _
      $region103: #{mobilenet_pallas.1} parent=5 // pred_fallthru
        _
    $region6: #{mobilenet_pallas.1} parent=1 // loop_footer
      %s24 = sadd.s32 1, %s20
    $region7: #{mobilenet_pallas.1} parent=1 // loop_footer_branch
      %19 = sbr.rel target = $region3
    $region8: #{mobilenet_pallas.1} parent=1 // loop_exit
      _
    %2130 = vsyncpa [#allocation5], 1
    %s2131 = scalar_lea.sflag [#allocation5], 1
    %2132 = vsyncpa %s2131, 1
    %2133 = vsyncpa [#allocation7], 1
    %2134 = vsyncpa [#allocation10], 1
    %2135 = vsyncpa [#allocation13], 1
    %2136 = vsyncpa [#allocation16], 1

</llo_original>
